<compile_context>
chip_gen: v5e
topology: v5e:2x2
jax: 0.10.0
libtpu: 0.0.40
codegen_flags: <defaults>
</compile_context>

<pallas_src>
import numpy as np
import jax
import jax.numpy as jnp
from jax.experimental import pallas as pl
from jax.experimental.pallas import tpu as pltpu

BINS = 30
MOMENTUM = 0.5
LANES = 128
HIST_ROWS = 32          # BINS rounded up to the 8-sublane multiple
NCORES = 2              # leading "parallel" grid axis (2 TCs on v7x; harmless on v5e/v6e)
MAX_TM = 512            # rows per tile: 512*128*4B = 256 KiB per input tile

# Same edge construction as the PyTorch module __init__.
_EDGES = [t / BINS for t in range(BINS + 1)]
_EDGES[-1] += 1e-6
_EDGE_LAST = _EDGES[-1]


def _fused_kernel(x_ref, t_ref, hist_ref, bsum_ref):
    """One pass: per-bin counts + per-bin BCE sums into (HIST_ROWS,128) per-core
    accumulators (row i = per-lane partials for bin i; lane reduce done in JAX)."""
    @pl.when(pl.program_id(1) == 0)
    def _():
        hist_ref[...] = jnp.zeros_like(hist_ref)
        bsum_ref[...] = jnp.zeros_like(bsum_ref)

    x = x_ref[...]
    tgt = t_ref[...]

    # Shared e = exp(-|x|); sigmoid via EUP reciprocal + one Newton refinement.
    e = jnp.exp(-jnp.abs(x))
    d = 1.0 + e
    r = pl.reciprocal(d, approx=True)
    r = r * (2.0 - d * r)                      # ~f32-accurate, off the EUP path
    sig = jnp.where(x >= 0, r, e * r)
    g = jnp.abs(sig - tgt)

    # Numerically stable BCE-with-logits (same formula PyTorch uses).
    bce = jnp.maximum(x, 0.0) - x * tgt + jnp.log1p(e)

    # Bin index: floor(g*BINS), clamped; g >= last edge (incl. padded sentinel
    # elements, target=2.0 -> g=1.5) maps to -1 and matches no bin.
    binf = jnp.floor(g * BINS)
    binf = jnp.where(g < _EDGE_LAST, jnp.minimum(binf, float(BINS - 1)), -1.0)

    for i in range(BINS):                      # static unrolled; sublane-only reduces
        sel = jnp.where(binf == i, 1.0, 0.0)
        cnt = jnp.sum(sel, axis=0, keepdims=True)          # (1, 128) per-lane counts
        bcs = jnp.sum(sel * bce, axis=0, keepdims=True)    # (1, 128) per-lane bce sums
        hist_ref[pl.ds(i, 1), :] = hist_ref[pl.ds(i, 1), :] + cnt
        bsum_ref[pl.ds(i, 1), :] = bsum_ref[pl.ds(i, 1), :] + bcs


def _round_up(v, m):
    return (v + m - 1) // m * m


def _tile_rows(rows):
    """Pick (rows_per_tile, inner_steps) so NCORES*tm*steps >= rows, tm%8==0,
    tm<=MAX_TM, with minimal padding."""
    per_core = -(-rows // NCORES)
    tm = min(MAX_TM, _round_up(per_core, 8))
    steps = -(-per_core // tm)
    tm = _round_up(-(-per_core // steps), 8)   # rebalance to trim padding
    return tm, steps


@jax.jit
def ghmc_loss(x, target, acc_sum):
    """Functional GHMCLoss forward. Returns (loss, updated_acc_sum)."""
    tot = x.size                               # static Python int
    rows = -(-tot // LANES)
    tm, steps = _tile_rows(rows)
    rows_pad = NCORES * tm * steps
    pad = rows_pad * LANES - tot

    xf = jnp.pad(x.reshape(-1).astype(jnp.float32), (0, pad))
    # Pad target with 2.0: padded elements get g = 1.5 >= last edge -> no bin.
    tf = jnp.pad(target.reshape(-1).astype(jnp.float32), (0, pad), constant_values=2.0)
    x2 = xf.reshape(rows_pad, LANES)
    t2 = tf.reshape(rows_pad, LANES)

    hist, bsum = pl.pallas_call(
        _fused_kernel,
        out_shape=(jax.ShapeDtypeStruct((NCORES * HIST_ROWS, LANES), jnp.float32),
                   jax.ShapeDtypeStruct((NCORES * HIST_ROWS, LANES), jnp.float32)),
        grid=(NCORES, steps),
        in_specs=[pl.BlockSpec((tm, LANES), lambda c, s: (c * steps + s, 0)),
                  pl.BlockSpec((tm, LANES), lambda c, s: (c * steps + s, 0))],
        out_specs=(pl.BlockSpec((HIST_ROWS, LANES), lambda c, s: (c, 0)),
                   pl.BlockSpec((HIST_ROWS, LANES), lambda c, s: (c, 0))),
        compiler_params=pltpu.CompilerParams(
            dimension_semantics=("parallel", "arbitrary")),
    )(x2, t2)

    # Reduce per-core, per-lane partials -> 30 counts and 30 BCE sums.
    counts = jnp.sum(hist.reshape(NCORES, HIST_ROWS, LANES)[:, :BINS, :], axis=(0, 2))
    bces = jnp.sum(bsum.reshape(NCORES, HIST_ROWS, LANES)[:, :BINS, :], axis=(0, 2))

    nonempty = counts > 0
    # Momentum EMA of acc_sum (only for non-empty bins), as in the module.
    acc_new = jnp.where(nonempty,
                        MOMENTUM * acc_sum + (1.0 - MOMENTUM) * counts,
                        acc_sum)
    bin_w = jnp.where(nonempty, tot / jnp.maximum(acc_new, 1e-30), 0.0)
    n = jnp.sum(nonempty.astype(jnp.int32))
    # weights.mean(): each element falls in exactly one bin -> sum_b counts_b*w_b / tot.
    mean_w = jnp.sum(counts * bin_w) / tot
    bin_w = jnp.where(n > 0, bin_w / jnp.maximum(mean_w, 1e-30), bin_w)

    loss = jnp.sum(bin_w * bces) / tot
    return loss, acc_new


def ghmc_ref(x, t, acc_sum_list, bins=BINS, mmt=MOMENTUM):
    """Pure NumPy mirror of the PyTorch forward (for verification)."""
    x = np.asarray(x, np.float32).ravel()
    t = np.asarray(t, np.float32).ravel()
    edges = [i / bins for i in range(bins + 1)]
    edges[-1] += 1e-6
    g = np.abs(1.0 / (1.0 + np.exp(-x)) - t)
    tot = x.size
    weights = np.zeros_like(x)
    acc = list(acc_sum_list)
    n = 0
    for i in range(bins):
        inds = (g >= edges[i]) & (g < edges[i + 1])
        num = int(inds.sum())
        if num > 0:
            if mmt > 0:
                acc[i] = mmt * acc[i] + (1 - mmt) * num
                weights[inds] = tot / acc[i]
            else:
                weights[inds] = tot / num
            n += 1
    if n > 0:
        weights = weights / weights.mean()
    bce = np.maximum(x, 0.0) - x * t + np.log1p(np.exp(-np.abs(x)))
    return float((weights * bce).sum() / tot)


if __name__ == "__main__":
    key = jax.random.PRNGKey(0)
    kx, kt = jax.random.split(key)
    B, C, H, W = 2, 4, 16, 16  # 2048 elements
    x = jax.random.normal(kx, (B, C, H, W), jnp.float32) * 2.0
    target = jax.random.bernoulli(kt, 0.5, (B, C, H, W)).astype(jnp.float32)

    # Module __init__ state: acc_sum = [0.0] * bins.
    acc_sum0 = jnp.zeros((BINS,), jnp.float32)

    loss, acc_sum1 = ghmc_loss(x, target, acc_sum0)
    loss = jax.block_until_ready(loss)
    jax.block_until_ready(acc_sum1)

    ref = ghmc_ref(np.asarray(x), np.asarray(target), [0.0] * BINS)
    np.testing.assert_allclose(float(loss), ref, rtol=2e-2, atol=1e-5)
    print("KERNEL_OK")
</pallas_src>

<mosaic_0001>
module attributes {stable_mosaic.version = 11 : i64} {
  func.func @_fused_kernel(%arg0: i32, %arg1: i32, %arg2: memref<8x128xf32, #tpu.memory_space<vmem>>, %arg3: memref<8x128xf32, #tpu.memory_space<vmem>>, %arg4: memref<32x128xf32, #tpu.memory_space<vmem>>, %arg5: memref<32x128xf32, #tpu.memory_space<vmem>>) attributes {dimension_semantics = [#tpu.dimension_semantics<parallel>, #tpu.dimension_semantics<arbitrary>], iteration_bounds = array<i64: 2, 1>, scalar_prefetch = 0 : i64, scratch_operands = 0 : i64, tpu.core_type = #tpu.core_type<tc>, window_params = [{transform_indices = @transform_0, window_bounds = array<i64: 8, 128>}, {transform_indices = @transform_1, window_bounds = array<i64: 8, 128>}, {transform_indices = @transform_2, window_bounds = array<i64: 32, 128>}, {transform_indices = @transform_3, window_bounds = array<i64: 32, 128>}]} {
    %c0_i32 = arith.constant 0 : i32
    %0 = arith.cmpi eq, %arg1, %c0_i32 : i32
    %1 = arith.extui %0 : i1 to i32
    %c0_i32_0 = arith.constant 0 : i32
    %2 = arith.cmpi ne, %1, %c0_i32_0 : i32
    scf.if %2 {
      %cst_373 = arith.constant 0.000000e+00 : f32
      %517 = vector.broadcast %cst_373 : f32 to vector<32x128xf32>
      %c0_374 = arith.constant 0 : index
      %c0_375 = arith.constant 0 : index
      %518 = vector.load %arg4[%c0_374, %c0_375] : memref<32x128xf32, #tpu.memory_space<vmem>>, vector<32x128xf32>
      tpu.vector_store %arg4[%c0_374, %c0_375], %517 {strides = array<i32>} : memref<32x128xf32, #tpu.memory_space<vmem>>, vector<32x128xf32>,
      %cst_376 = arith.constant 0.000000e+00 : f32
      %519 = vector.broadcast %cst_376 : f32 to vector<32x128xf32>
      %c0_377 = arith.constant 0 : index
      %c0_378 = arith.constant 0 : index
      %520 = vector.load %arg5[%c0_377, %c0_378] : memref<32x128xf32, #tpu.memory_space<vmem>>, vector<32x128xf32>
      tpu.vector_store %arg5[%c0_377, %c0_378], %519 {strides = array<i32>} : memref<32x128xf32, #tpu.memory_space<vmem>>, vector<32x128xf32>,
    } else {
    }
    %c0 = arith.constant 0 : index
    %c0_1 = arith.constant 0 : index
    %3 = vector.load %arg2[%c0, %c0_1] : memref<8x128xf32, #tpu.memory_space<vmem>>, vector<8x128xf32>
    %c0_2 = arith.constant 0 : index
    %c0_3 = arith.constant 0 : index
    %4 = vector.load %arg3[%c0_2, %c0_3] : memref<8x128xf32, #tpu.memory_space<vmem>>, vector<8x128xf32>
    %5 = math.absf %3 : vector<8x128xf32>
    %cst = arith.constant 0.000000e+00 : f32
    %6 = vector.broadcast %cst : f32 to vector<8x128xf32>
    %7 = arith.subf %6, %5 : vector<8x128xf32>
    %8 = math.exp %7 : vector<8x128xf32>
    %cst_4 = arith.constant 1.000000e+00 : f32
    %9 = vector.broadcast %cst_4 : f32 to vector<8x128xf32>
    %10 = arith.addf %9, %8 : vector<8x128xf32>
    %11 = tpu.reciprocal %10 {approx = true} : vector<8x128xf32> -> vector<8x128xf32>
    %12 = arith.mulf %10, %11 : vector<8x128xf32>
    %cst_5 = arith.constant 2.000000e+00 : f32
    %13 = vector.broadcast %cst_5 : f32 to vector<8x128xf32>
    %14 = arith.subf %13, %12 : vector<8x128xf32>
    %15 = arith.mulf %11, %14 : vector<8x128xf32>
    %cst_6 = arith.constant 0.000000e+00 : f32
    %16 = vector.broadcast %cst_6 : f32 to vector<8x128xf32>
    %17 = arith.cmpf oge, %3, %16 : vector<8x128xf32>
    %18 = arith.mulf %8, %15 : vector<8x128xf32>
    %19 = arith.select %17, %15, %18 : vector<8x128xi1>, vector<8x128xf32>
    %20 = arith.subf %19, %4 : vector<8x128xf32>
    %21 = math.absf %20 : vector<8x128xf32>
    %cst_7 = arith.constant 0.000000e+00 : f32
    %22 = vector.broadcast %cst_7 : f32 to vector<8x128xf32>
    %23 = arith.maximumf %3, %22 : vector<8x128xf32>
    %24 = arith.mulf %3, %4 : vector<8x128xf32>
    %25 = arith.subf %23, %24 : vector<8x128xf32>
    %26 = math.log1p %8 : vector<8x128xf32>
    %27 = arith.addf %25, %26 : vector<8x128xf32>
    %cst_8 = arith.constant 3.000000e+01 : f32
    %28 = vector.broadcast %cst_8 : f32 to vector<8x128xf32>
    %29 = arith.mulf %21, %28 : vector<8x128xf32>
    %30 = math.floor %29 : vector<8x128xf32>
    %cst_9 = arith.constant 1.00000095 : f32
    %31 = vector.broadcast %cst_9 : f32 to vector<8x128xf32>
    %32 = arith.cmpf olt, %21, %31 : vector<8x128xf32>
    %cst_10 = arith.constant 2.900000e+01 : f32
    %33 = vector.broadcast %cst_10 : f32 to vector<8x128xf32>
    %34 = arith.minimumf %30, %33 : vector<8x128xf32>
    %cst_11 = arith.constant -1.000000e+00 : f32
    %35 = vector.broadcast %cst_11 : f32 to vector<8x128xf32>
    %36 = arith.select %32, %34, %35 : vector<8x128xi1>, vector<8x128xf32>
    %cst_12 = arith.constant 0.000000e+00 : f32
    %37 = vector.broadcast %cst_12 : f32 to vector<8x128xf32>
    %38 = arith.cmpf oeq, %36, %37 : vector<8x128xf32>
    %cst_13 = arith.constant 1.000000e+00 : f32
    %cst_14 = arith.constant 0.000000e+00 : f32
    %39 = vector.broadcast %cst_13 : f32 to vector<8x128xf32>
    %40 = vector.broadcast %cst_14 : f32 to vector<8x128xf32>
    %41 = arith.select %38, %39, %40 : vector<8x128xi1>, vector<8x128xf32>
    %cst_15 = arith.constant dense<0.000000e+00> : vector<128xf32>
    %42 = vector.multi_reduction <add>, %41, %cst_15 [0] : vector<8x128xf32> to vector<128xf32>
    %43 = vector.shape_cast %42 : vector<128xf32> to vector<1x128xf32>
    %44 = arith.mulf %41, %27 : vector<8x128xf32>
    %cst_16 = arith.constant dense<0.000000e+00> : vector<128xf32>
    %45 = vector.multi_reduction <add>, %44, %cst_16 [0] : vector<8x128xf32> to vector<128xf32>
    %46 = vector.shape_cast %45 : vector<128xf32> to vector<1x128xf32>
    %c0_17 = arith.constant 0 : index
    %c0_18 = arith.constant 0 : index
    %47 = vector.load %arg4[%c0_17, %c0_18] : memref<32x128xf32, #tpu.memory_space<vmem>>, vector<1x128xf32>
    %48 = arith.addf %47, %43 : vector<1x128xf32>
    %c0_19 = arith.constant 0 : index
    %c0_20 = arith.constant 0 : index
    %49 = vector.load %arg4[%c0_19, %c0_20] : memref<32x128xf32, #tpu.memory_space<vmem>>, vector<1x128xf32>
    tpu.vector_store %arg4[%c0_19, %c0_20], %48 {strides = array<i32>} : memref<32x128xf32, #tpu.memory_space<vmem>>, vector<1x128xf32>,
    %c0_21 = arith.constant 0 : index
    %c0_22 = arith.constant 0 : index
    %50 = vector.load %arg5[%c0_21, %c0_22] : memref<32x128xf32, #tpu.memory_space<vmem>>, vector<1x128xf32>
    %51 = arith.addf %50, %46 : vector<1x128xf32>
    %c0_23 = arith.constant 0 : index
    %c0_24 = arith.constant 0 : index
    %52 = vector.load %arg5[%c0_23, %c0_24] : memref<32x128xf32, #tpu.memory_space<vmem>>, vector<1x128xf32>
    tpu.vector_store %arg5[%c0_23, %c0_24], %51 {strides = array<i32>} : memref<32x128xf32, #tpu.memory_space<vmem>>, vector<1x128xf32>,
    %cst_25 = arith.constant 1.000000e+00 : f32
    %53 = vector.broadcast %cst_25 : f32 to vector<8x128xf32>
    %54 = arith.cmpf oeq, %36, %53 : vector<8x128xf32>
    %cst_26 = arith.constant 1.000000e+00 : f32
    %cst_27 = arith.constant 0.000000e+00 : f32
    %55 = vector.broadcast %cst_26 : f32 to vector<8x128xf32>
    %56 = vector.broadcast %cst_27 : f32 to vector<8x128xf32>
    %57 = arith.select %54, %55, %56 : vector<8x128xi1>, vector<8x128xf32>
    %cst_28 = arith.constant dense<0.000000e+00> : vector<128xf32>
    %58 = vector.multi_reduction <add>, %57, %cst_28 [0] : vector<8x128xf32> to vector<128xf32>
    %59 = vector.shape_cast %58 : vector<128xf32> to vector<1x128xf32>
    %60 = arith.mulf %57, %27 : vector<8x128xf32>
    %cst_29 = arith.constant dense<0.000000e+00> : vector<128xf32>
    %61 = vector.multi_reduction <add>, %60, %cst_29 [0] : vector<8x128xf32> to vector<128xf32>
    %62 = vector.shape_cast %61 : vector<128xf32> to vector<1x128xf32>
    %c1 = arith.constant 1 : index
    %c0_30 = arith.constant 0 : index
    %63 = vector.load %arg4[%c1, %c0_30] : memref<32x128xf32, #tpu.memory_space<vmem>>, vector<1x128xf32>
    %64 = arith.addf %63, %59 : vector<1x128xf32>
    %c1_31 = arith.constant 1 : index
    %c0_32 = arith.constant 0 : index
    %65 = vector.load %arg4[%c1_31, %c0_32] : memref<32x128xf32, #tpu.memory_space<vmem>>, vector<1x128xf32>
    tpu.vector_store %arg4[%c1_31, %c0_32], %64 {strides = array<i32>} : memref<32x128xf32, #tpu.memory_space<vmem>>, vector<1x128xf32>,
    %c1_33 = arith.constant 1 : index
    %c0_34 = arith.constant 0 : index
    %66 = vector.load %arg5[%c1_33, %c0_34] : memref<32x128xf32, #tpu.memory_space<vmem>>, vector<1x128xf32>
    %67 = arith.addf %66, %62 : vector<1x128xf32>
    %c1_35 = arith.constant 1 : index
    %c0_36 = arith.constant 0 : index
    %68 = vector.load %arg5[%c1_35, %c0_36] : memref<32x128xf32, #tpu.memory_space<vmem>>, vector<1x128xf32>
    tpu.vector_store %arg5[%c1_35, %c0_36], %67 {strides = array<i32>} : memref<32x128xf32, #tpu.memory_space<vmem>>, vector<1x128xf32>,
    %cst_37 = arith.constant 2.000000e+00 : f32
    %69 = vector.broadcast %cst_37 : f32 to vector<8x128xf32>
    %70 = arith.cmpf oeq, %36, %69 : vector<8x128xf32>
    %cst_38 = arith.constant 1.000000e+00 : f32
    %cst_39 = arith.constant 0.000000e+00 : f32
    %71 = vector.broadcast %cst_38 : f32 to vector<8x128xf32>
    %72 = vector.broadcast %cst_39 : f32 to vector<8x128xf32>
    %73 = arith.select %70, %71, %72 : vector<8x128xi1>, vector<8x128xf32>
    %cst_40 = arith.constant dense<0.000000e+00> : vector<128xf32>
    %74 = vector.multi_reduction <add>, %73, %cst_40 [0] : vector<8x128xf32> to vector<128xf32>
    %75 = vector.shape_cast %74 : vector<128xf32> to vector<1x128xf32>
    %76 = arith.mulf %73, %27 : vector<8x128xf32>
    %cst_41 = arith.constant dense<0.000000e+00> : vector<128xf32>
    %77 = vector.multi_reduction <add>, %76, %cst_41 [0] : vector<8x128xf32> to vector<128xf32>
    %78 = vector.shape_cast %77 : vector<128xf32> to vector<1x128xf32>
    %c2 = arith.constant 2 : index
    %c0_42 = arith.constant 0 : index
    %79 = vector.load %arg4[%c2, %c0_42] : memref<32x128xf32, #tpu.memory_space<vmem>>, vector<1x128xf32>
    %80 = arith.addf %79, %75 : vector<1x128xf32>
    %c2_43 = arith.constant 2 : index
    %c0_44 = arith.constant 0 : index
    %81 = vector.load %arg4[%c2_43, %c0_44] : memref<32x128xf32, #tpu.memory_space<vmem>>, vector<1x128xf32>
    tpu.vector_store %arg4[%c2_43, %c0_44], %80 {strides = array<i32>} : memref<32x128xf32, #tpu.memory_space<vmem>>, vector<1x128xf32>,
    %c2_45 = arith.constant 2 : index
    %c0_46 = arith.constant 0 : index
    %82 = vector.load %arg5[%c2_45, %c0_46] : memref<32x128xf32, #tpu.memory_space<vmem>>, vector<1x128xf32>
    %83 = arith.addf %82, %78 : vector<1x128xf32>
    %c2_47 = arith.constant 2 : index
    %c0_48 = arith.constant 0 : index
    %84 = vector.load %arg5[%c2_47, %c0_48] : memref<32x128xf32, #tpu.memory_space<vmem>>, vector<1x128xf32>
    tpu.vector_store %arg5[%c2_47, %c0_48], %83 {strides = array<i32>} : memref<32x128xf32, #tpu.memory_space<vmem>>, vector<1x128xf32>,
    %cst_49 = arith.constant 3.000000e+00 : f32
    %85 = vector.broadcast %cst_49 : f32 to vector<8x128xf32>
    %86 = arith.cmpf oeq, %36, %85 : vector<8x128xf32>
    %cst_50 = arith.constant 1.000000e+00 : f32
    %cst_51 = arith.constant 0.000000e+00 : f32
    %87 = vector.broadcast %cst_50 : f32 to vector<8x128xf32>
    %88 = vector.broadcast %cst_51 : f32 to vector<8x128xf32>
    %89 = arith.select %86, %87, %88 : vector<8x128xi1>, vector<8x128xf32>
    %cst_52 = arith.constant dense<0.000000e+00> : vector<128xf32>
    %90 = vector.multi_reduction <add>, %89, %cst_52 [0] : vector<8x128xf32> to vector<128xf32>
    %91 = vector.shape_cast %90 : vector<128xf32> to vector<1x128xf32>
    %92 = arith.mulf %89, %27 : vector<8x128xf32>
    %cst_53 = arith.constant dense<0.000000e+00> : vector<128xf32>
    %93 = vector.multi_reduction <add>, %92, %cst_53 [0] : vector<8x128xf32> to vector<128xf32>
    %94 = vector.shape_cast %93 : vector<128xf32> to vector<1x128xf32>
    %c3 = arith.constant 3 : index
    %c0_54 = arith.constant 0 : index
    %95 = vector.load %arg4[%c3, %c0_54] : memref<32x128xf32, #tpu.memory_space<vmem>>, vector<1x128xf32>
    %96 = arith.addf %95, %91 : vector<1x128xf32>
    %c3_55 = arith.constant 3 : index
    %c0_56 = arith.constant 0 : index
    %97 = vector.load %arg4[%c3_55, %c0_56] : memref<32x128xf32, #tpu.memory_space<vmem>>, vector<1x128xf32>
    tpu.vector_store %arg4[%c3_55, %c0_56], %96 {strides = array<i32>} : memref<32x128xf32, #tpu.memory_space<vmem>>, vector<1x128xf32>,
    %c3_57 = arith.constant 3 : index
    %c0_58 = arith.constant 0 : index
    %98 = vector.load %arg5[%c3_57, %c0_58] : memref<32x128xf32, #tpu.memory_space<vmem>>, vector<1x128xf32>
    %99 = arith.addf %98, %94 : vector<1x128xf32>
    %c3_59 = arith.constant 3 : index
    %c0_60 = arith.constant 0 : index
    %100 = vector.load %arg5[%c3_59, %c0_60] : memref<32x128xf32, #tpu.memory_space<vmem>>, vector<1x128xf32>
    tpu.vector_store %arg5[%c3_59, %c0_60], %99 {strides = array<i32>} : memref<32x128xf32, #tpu.memory_space<vmem>>, vector<1x128xf32>,
    %cst_61 = arith.constant 4.000000e+00 : f32
    %101 = vector.broadcast %cst_61 : f32 to vector<8x128xf32>
    %102 = arith.cmpf oeq, %36, %101 : vector<8x128xf32>
    %cst_62 = arith.constant 1.000000e+00 : f32
    %cst_63 = arith.constant 0.000000e+00 : f32
    %103 = vector.broadcast %cst_62 : f32 to vector<8x128xf32>
    %104 = vector.broadcast %cst_63 : f32 to vector<8x128xf32>
    %105 = arith.select %102, %103, %104 : vector<8x128xi1>, vector<8x128xf32>
    %cst_64 = arith.constant dense<0.000000e+00> : vector<128xf32>
    %106 = vector.multi_reduction <add>, %105, %cst_64 [0] : vector<8x128xf32> to vector<128xf32>
    %107 = vector.shape_cast %106 : vector<128xf32> to vector<1x128xf32>
    %108 = arith.mulf %105, %27 : vector<8x128xf32>
    %cst_65 = arith.constant dense<0.000000e+00> : vector<128xf32>
    %109 = vector.multi_reduction <add>, %108, %cst_65 [0] : vector<8x128xf32> to vector<128xf32>
    %110 = vector.shape_cast %109 : vector<128xf32> to vector<1x128xf32>
    %c4 = arith.constant 4 : index
    %c0_66 = arith.constant 0 : index
    %111 = vector.load %arg4[%c4, %c0_66] : memref<32x128xf32, #tpu.memory_space<vmem>>, vector<1x128xf32>
    %112 = arith.addf %111, %107 : vector<1x128xf32>
    %c4_67 = arith.constant 4 : index
    %c0_68 = arith.constant 0 : index
    %113 = vector.load %arg4[%c4_67, %c0_68] : memref<32x128xf32, #tpu.memory_space<vmem>>, vector<1x128xf32>
    tpu.vector_store %arg4[%c4_67, %c0_68], %112 {strides = array<i32>} : memref<32x128xf32, #tpu.memory_space<vmem>>, vector<1x128xf32>,
    %c4_69 = arith.constant 4 : index
    %c0_70 = arith.constant 0 : index
    %114 = vector.load %arg5[%c4_69, %c0_70] : memref<32x128xf32, #tpu.memory_space<vmem>>, vector<1x128xf32>
    %115 = arith.addf %114, %110 : vector<1x128xf32>
    %c4_71 = arith.constant 4 : index
    %c0_72 = arith.constant 0 : index
    %116 = vector.load %arg5[%c4_71, %c0_72] : memref<32x128xf32, #tpu.memory_space<vmem>>, vector<1x128xf32>
    tpu.vector_store %arg5[%c4_71, %c0_72], %115 {strides = array<i32>} : memref<32x128xf32, #tpu.memory_space<vmem>>, vector<1x128xf32>,
    %cst_73 = arith.constant 5.000000e+00 : f32
    %117 = vector.broadcast %cst_73 : f32 to vector<8x128xf32>
    %118 = arith.cmpf oeq, %36, %117 : vector<8x128xf32>
    %cst_74 = arith.constant 1.000000e+00 : f32
    %cst_75 = arith.constant 0.000000e+00 : f32
    %119 = vector.broadcast %cst_74 : f32 to vector<8x128xf32>
    %120 = vector.broadcast %cst_75 : f32 to vector<8x128xf32>
    %121 = arith.select %118, %119, %120 : vector<8x128xi1>, vector<8x128xf32>
    %cst_76 = arith.constant dense<0.000000e+00> : vector<128xf32>
    %122 = vector.multi_reduction <add>, %121, %cst_76 [0] : vector<8x128xf32> to vector<128xf32>
    %123 = vector.shape_cast %122 : vector<128xf32> to vector<1x128xf32>
    %124 = arith.mulf %121, %27 : vector<8x128xf32>
    %cst_77 = arith.constant dense<0.000000e+00> : vector<128xf32>
    %125 = vector.multi_reduction <add>, %124, %cst_77 [0] : vector<8x128xf32> to vector<128xf32>
    %126 = vector.shape_cast %125 : vector<128xf32> to vector<1x128xf32>
    %c5 = arith.constant 5 : index
    %c0_78 = arith.constant 0 : index
    %127 = vector.load %arg4[%c5, %c0_78] : memref<32x128xf32, #tpu.memory_space<vmem>>, vector<1x128xf32>
    %128 = arith.addf %127, %123 : vector<1x128xf32>
    %c5_79 = arith.constant 5 : index
    %c0_80 = arith.constant 0 : index
    %129 = vector.load %arg4[%c5_79, %c0_80] : memref<32x128xf32, #tpu.memory_space<vmem>>, vector<1x128xf32>
    tpu.vector_store %arg4[%c5_79, %c0_80], %128 {strides = array<i32>} : memref<32x128xf32, #tpu.memory_space<vmem>>, vector<1x128xf32>,
    %c5_81 = arith.constant 5 : index
    %c0_82 = arith.constant 0 : index
    %130 = vector.load %arg5[%c5_81, %c0_82] : memref<32x128xf32, #tpu.memory_space<vmem>>, vector<1x128xf32>
    %131 = arith.addf %130, %126 : vector<1x128xf32>
    %c5_83 = arith.constant 5 : index
    %c0_84 = arith.constant 0 : index
    %132 = vector.load %arg5[%c5_83, %c0_84] : memref<32x128xf32, #tpu.memory_space<vmem>>, vector<1x128xf32>
    tpu.vector_store %arg5[%c5_83, %c0_84], %131 {strides = array<i32>} : memref<32x128xf32, #tpu.memory_space<vmem>>, vector<1x128xf32>,
    %cst_85 = arith.constant 6.000000e+00 : f32
    %133 = vector.broadcast %cst_85 : f32 to vector<8x128xf32>
    %134 = arith.cmpf oeq, %36, %133 : vector<8x128xf32>
    %cst_86 = arith.constant 1.000000e+00 : f32
    %cst_87 = arith.constant 0.000000e+00 : f32
    %135 = vector.broadcast %cst_86 : f32 to vector<8x128xf32>
    %136 = vector.broadcast %cst_87 : f32 to vector<8x128xf32>
    %137 = arith.select %134, %135, %136 : vector<8x128xi1>, vector<8x128xf32>
    %cst_88 = arith.constant dense<0.000000e+00> : vector<128xf32>
    %138 = vector.multi_reduction <add>, %137, %cst_88 [0] : vector<8x128xf32> to vector<128xf32>
    %139 = vector.shape_cast %138 : vector<128xf32> to vector<1x128xf32>
    %140 = arith.mulf %137, %27 : vector<8x128xf32>
    %cst_89 = arith.constant dense<0.000000e+00> : vector<128xf32>
    %141 = vector.multi_reduction <add>, %140, %cst_89 [0] : vector<8x128xf32> to vector<128xf32>
    %142 = vector.shape_cast %141 : vector<128xf32> to vector<1x128xf32>
    %c6 = arith.constant 6 : index
    %c0_90 = arith.constant 0 : index
    %143 = vector.load %arg4[%c6, %c0_90] : memref<32x128xf32, #tpu.memory_space<vmem>>, vector<1x128xf32>
    %144 = arith.addf %143, %139 : vector<1x128xf32>
    %c6_91 = arith.constant 6 : index
    %c0_92 = arith.constant 0 : index
    %145 = vector.load %arg4[%c6_91, %c0_92] : memref<32x128xf32, #tpu.memory_space<vmem>>, vector<1x128xf32>
    tpu.vector_store %arg4[%c6_91, %c0_92], %144 {strides = array<i32>} : memref<32x128xf32, #tpu.memory_space<vmem>>, vector<1x128xf32>,
    %c6_93 = arith.constant 6 : index
    %c0_94 = arith.constant 0 : index
    %146 = vector.load %arg5[%c6_93, %c0_94] : memref<32x128xf32, #tpu.memory_space<vmem>>, vector<1x128xf32>
    %147 = arith.addf %146, %142 : vector<1x128xf32>
    %c6_95 = arith.constant 6 : index
    %c0_96 = arith.constant 0 : index
    %148 = vector.load %arg5[%c6_95, %c0_96] : memref<32x128xf32, #tpu.memory_space<vmem>>, vector<1x128xf32>
    tpu.vector_store %arg5[%c6_95, %c0_96], %147 {strides = array<i32>} : memref<32x128xf32, #tpu.memory_space<vmem>>, vector<1x128xf32>,
    %cst_97 = arith.constant 7.000000e+00 : f32
    %149 = vector.broadcast %cst_97 : f32 to vector<8x128xf32>
    %150 = arith.cmpf oeq, %36, %149 : vector<8x128xf32>
    %cst_98 = arith.constant 1.000000e+00 : f32
    %cst_99 = arith.constant 0.000000e+00 : f32
    %151 = vector.broadcast %cst_98 : f32 to vector<8x128xf32>
    %152 = vector.broadcast %cst_99 : f32 to vector<8x128xf32>
    %153 = arith.select %150, %151, %152 : vector<8x128xi1>, vector<8x128xf32>
    %cst_100 = arith.constant dense<0.000000e+00> : vector<128xf32>
    %154 = vector.multi_reduction <add>, %153, %cst_100 [0] : vector<8x128xf32> to vector<128xf32>
    %155 = vector.shape_cast %154 : vector<128xf32> to vector<1x128xf32>
    %156 = arith.mulf %153, %27 : vector<8x128xf32>
    %cst_101 = arith.constant dense<0.000000e+00> : vector<128xf32>
    %157 = vector.multi_reduction <add>, %156, %cst_101 [0] : vector<8x128xf32> to vector<128xf32>
    %158 = vector.shape_cast %157 : vector<128xf32> to vector<1x128xf32>
    %c7 = arith.constant 7 : index
    %c0_102 = arith.constant 0 : index
    %159 = vector.load %arg4[%c7, %c0_102] : memref<32x128xf32, #tpu.memory_space<vmem>>, vector<1x128xf32>
    %160 = arith.addf %159, %155 : vector<1x128xf32>
    %c7_103 = arith.constant 7 : index
    %c0_104 = arith.constant 0 : index
    %161 = vector.load %arg4[%c7_103, %c0_104] : memref<32x128xf32, #tpu.memory_space<vmem>>, vector<1x128xf32>
    tpu.vector_store %arg4[%c7_103, %c0_104], %160 {strides = array<i32>} : memref<32x128xf32, #tpu.memory_space<vmem>>, vector<1x128xf32>,
    %c7_105 = arith.constant 7 : index
    %c0_106 = arith.constant 0 : index
    %162 = vector.load %arg5[%c7_105, %c0_106] : memref<32x128xf32, #tpu.memory_space<vmem>>, vector<1x128xf32>
    %163 = arith.addf %162, %158 : vector<1x128xf32>
    %c7_107 = arith.constant 7 : index
    %c0_108 = arith.constant 0 : index
    %164 = vector.load %arg5[%c7_107, %c0_108] : memref<32x128xf32, #tpu.memory_space<vmem>>, vector<1x128xf32>
    tpu.vector_store %arg5[%c7_107, %c0_108], %163 {strides = array<i32>} : memref<32x128xf32, #tpu.memory_space<vmem>>, vector<1x128xf32>,
    %cst_109 = arith.constant 8.000000e+00 : f32
    %165 = vector.broadcast %cst_109 : f32 to vector<8x128xf32>
    %166 = arith.cmpf oeq, %36, %165 : vector<8x128xf32>
    %cst_110 = arith.constant 1.000000e+00 : f32
    %cst_111 = arith.constant 0.000000e+00 : f32
    %167 = vector.broadcast %cst_110 : f32 to vector<8x128xf32>
    %168 = vector.broadcast %cst_111 : f32 to vector<8x128xf32>
    %169 = arith.select %166, %167, %168 : vector<8x128xi1>, vector<8x128xf32>
    %cst_112 = arith.constant dense<0.000000e+00> : vector<128xf32>
    %170 = vector.multi_reduction <add>, %169, %cst_112 [0] : vector<8x128xf32> to vector<128xf32>
    %171 = vector.shape_cast %170 : vector<128xf32> to vector<1x128xf32>
    %172 = arith.mulf %169, %27 : vector<8x128xf32>
    %cst_113 = arith.constant dense<0.000000e+00> : vector<128xf32>
    %173 = vector.multi_reduction <add>, %172, %cst_113 [0] : vector<8x128xf32> to vector<128xf32>
    %174 = vector.shape_cast %173 : vector<128xf32> to vector<1x128xf32>
    %c8 = arith.constant 8 : index
    %c0_114 = arith.constant 0 : index
    %175 = vector.load %arg4[%c8, %c0_114] : memref<32x128xf32, #tpu.memory_space<vmem>>, vector<1x128xf32>
    %176 = arith.addf %175, %171 : vector<1x128xf32>
    %c8_115 = arith.constant 8 : index
    %c0_116 = arith.constant 0 : index
    %177 = vector.load %arg4[%c8_115, %c0_116] : memref<32x128xf32, #tpu.memory_space<vmem>>, vector<1x128xf32>
    tpu.vector_store %arg4[%c8_115, %c0_116], %176 {strides = array<i32>} : memref<32x128xf32, #tpu.memory_space<vmem>>, vector<1x128xf32>,
    %c8_117 = arith.constant 8 : index
    %c0_118 = arith.constant 0 : index
    %178 = vector.load %arg5[%c8_117, %c0_118] : memref<32x128xf32, #tpu.memory_space<vmem>>, vector<1x128xf32>
    %179 = arith.addf %178, %174 : vector<1x128xf32>
    %c8_119 = arith.constant 8 : index
    %c0_120 = arith.constant 0 : index
    %180 = vector.load %arg5[%c8_119, %c0_120] : memref<32x128xf32, #tpu.memory_space<vmem>>, vector<1x128xf32>
    tpu.vector_store %arg5[%c8_119, %c0_120], %179 {strides = array<i32>} : memref<32x128xf32, #tpu.memory_space<vmem>>, vector<1x128xf32>,
    %cst_121 = arith.constant 9.000000e+00 : f32
    %181 = vector.broadcast %cst_121 : f32 to vector<8x128xf32>
    %182 = arith.cmpf oeq, %36, %181 : vector<8x128xf32>
    %cst_122 = arith.constant 1.000000e+00 : f32
    %cst_123 = arith.constant 0.000000e+00 : f32
    %183 = vector.broadcast %cst_122 : f32 to vector<8x128xf32>
    %184 = vector.broadcast %cst_123 : f32 to vector<8x128xf32>
    %185 = arith.select %182, %183, %184 : vector<8x128xi1>, vector<8x128xf32>
    %cst_124 = arith.constant dense<0.000000e+00> : vector<128xf32>
    %186 = vector.multi_reduction <add>, %185, %cst_124 [0] : vector<8x128xf32> to vector<128xf32>
    %187 = vector.shape_cast %186 : vector<128xf32> to vector<1x128xf32>
    %188 = arith.mulf %185, %27 : vector<8x128xf32>
    %cst_125 = arith.constant dense<0.000000e+00> : vector<128xf32>
    %189 = vector.multi_reduction <add>, %188, %cst_125 [0] : vector<8x128xf32> to vector<128xf32>
    %190 = vector.shape_cast %189 : vector<128xf32> to vector<1x128xf32>
    %c9 = arith.constant 9 : index
    %c0_126 = arith.constant 0 : index
    %191 = vector.load %arg4[%c9, %c0_126] : memref<32x128xf32, #tpu.memory_space<vmem>>, vector<1x128xf32>
    %192 = arith.addf %191, %187 : vector<1x128xf32>
    %c9_127 = arith.constant 9 : index
    %c0_128 = arith.constant 0 : index
    %193 = vector.load %arg4[%c9_127, %c0_128] : memref<32x128xf32, #tpu.memory_space<vmem>>, vector<1x128xf32>
    tpu.vector_store %arg4[%c9_127, %c0_128], %192 {strides = array<i32>} : memref<32x128xf32, #tpu.memory_space<vmem>>, vector<1x128xf32>,
    %c9_129 = arith.constant 9 : index
    %c0_130 = arith.constant 0 : index
    %194 = vector.load %arg5[%c9_129, %c0_130] : memref<32x128xf32, #tpu.memory_space<vmem>>, vector<1x128xf32>
    %195 = arith.addf %194, %190 : vector<1x128xf32>
    %c9_131 = arith.constant 9 : index
    %c0_132 = arith.constant 0 : index
    %196 = vector.load %arg5[%c9_131, %c0_132] : memref<32x128xf32, #tpu.memory_space<vmem>>, vector<1x128xf32>
    tpu.vector_store %arg5[%c9_131, %c0_132], %195 {strides = array<i32>} : memref<32x128xf32, #tpu.memory_space<vmem>>, vector<1x128xf32>,
    %cst_133 = arith.constant 1.000000e+01 : f32
    %197 = vector.broadcast %cst_133 : f32 to vector<8x128xf32>
    %198 = arith.cmpf oeq, %36, %197 : vector<8x128xf32>
    %cst_134 = arith.constant 1.000000e+00 : f32
    %cst_135 = arith.constant 0.000000e+00 : f32
    %199 = vector.broadcast %cst_134 : f32 to vector<8x128xf32>
    %200 = vector.broadcast %cst_135 : f32 to vector<8x128xf32>
    %201 = arith.select %198, %199, %200 : vector<8x128xi1>, vector<8x128xf32>
    %cst_136 = arith.constant dense<0.000000e+00> : vector<128xf32>
    %202 = vector.multi_reduction <add>, %201, %cst_136 [0] : vector<8x128xf32> to vector<128xf32>
    %203 = vector.shape_cast %202 : vector<128xf32> to vector<1x128xf32>
    %204 = arith.mulf %201, %27 : vector<8x128xf32>
    %cst_137 = arith.constant dense<0.000000e+00> : vector<128xf32>
    %205 = vector.multi_reduction <add>, %204, %cst_137 [0] : vector<8x128xf32> to vector<128xf32>
    %206 = vector.shape_cast %205 : vector<128xf32> to vector<1x128xf32>
    %c10 = arith.constant 10 : index
    %c0_138 = arith.constant 0 : index
    %207 = vector.load %arg4[%c10, %c0_138] : memref<32x128xf32, #tpu.memory_space<vmem>>, vector<1x128xf32>
    %208 = arith.addf %207, %203 : vector<1x128xf32>
    %c10_139 = arith.constant 10 : index
    %c0_140 = arith.constant 0 : index
    %209 = vector.load %arg4[%c10_139, %c0_140] : memref<32x128xf32, #tpu.memory_space<vmem>>, vector<1x128xf32>
    tpu.vector_store %arg4[%c10_139, %c0_140], %208 {strides = array<i32>} : memref<32x128xf32, #tpu.memory_space<vmem>>, vector<1x128xf32>,
    %c10_141 = arith.constant 10 : index
    %c0_142 = arith.constant 0 : index
    %210 = vector.load %arg5[%c10_141, %c0_142] : memref<32x128xf32, #tpu.memory_space<vmem>>, vector<1x128xf32>
    %211 = arith.addf %210, %206 : vector<1x128xf32>
    %c10_143 = arith.constant 10 : index
    %c0_144 = arith.constant 0 : index
    %212 = vector.load %arg5[%c10_143, %c0_144] : memref<32x128xf32, #tpu.memory_space<vmem>>, vector<1x128xf32>
    tpu.vector_store %arg5[%c10_143, %c0_144], %211 {strides = array<i32>} : memref<32x128xf32, #tpu.memory_space<vmem>>, vector<1x128xf32>,
    %cst_145 = arith.constant 1.100000e+01 : f32
    %213 = vector.broadcast %cst_145 : f32 to vector<8x128xf32>
    %214 = arith.cmpf oeq, %36, %213 : vector<8x128xf32>
    %cst_146 = arith.constant 1.000000e+00 : f32
    %cst_147 = arith.constant 0.000000e+00 : f32
    %215 = vector.broadcast %cst_146 : f32 to vector<8x128xf32>
    %216 = vector.broadcast %cst_147 : f32 to vector<8x128xf32>
    %217 = arith.select %214, %215, %216 : vector<8x128xi1>, vector<8x128xf32>
    %cst_148 = arith.constant dense<0.000000e+00> : vector<128xf32>
    %218 = vector.multi_reduction <add>, %217, %cst_148 [0] : vector<8x128xf32> to vector<128xf32>
    %219 = vector.shape_cast %218 : vector<128xf32> to vector<1x128xf32>
    %220 = arith.mulf %217, %27 : vector<8x128xf32>
    %cst_149 = arith.constant dense<0.000000e+00> : vector<128xf32>
    %221 = vector.multi_reduction <add>, %220, %cst_149 [0] : vector<8x128xf32> to vector<128xf32>
    %222 = vector.shape_cast %221 : vector<128xf32> to vector<1x128xf32>
    %c11 = arith.constant 11 : index
    %c0_150 = arith.constant 0 : index
    %223 = vector.load %arg4[%c11, %c0_150] : memref<32x128xf32, #tpu.memory_space<vmem>>, vector<1x128xf32>
    %224 = arith.addf %223, %219 : vector<1x128xf32>
    %c11_151 = arith.constant 11 : index
    %c0_152 = arith.constant 0 : index
    %225 = vector.load %arg4[%c11_151, %c0_152] : memref<32x128xf32, #tpu.memory_space<vmem>>, vector<1x128xf32>
    tpu.vector_store %arg4[%c11_151, %c0_152], %224 {strides = array<i32>} : memref<32x128xf32, #tpu.memory_space<vmem>>, vector<1x128xf32>,
    %c11_153 = arith.constant 11 : index
    %c0_154 = arith.constant 0 : index
    %226 = vector.load %arg5[%c11_153, %c0_154] : memref<32x128xf32, #tpu.memory_space<vmem>>, vector<1x128xf32>
    %227 = arith.addf %226, %222 : vector<1x128xf32>
    %c11_155 = arith.constant 11 : index
    %c0_156 = arith.constant 0 : index
    %228 = vector.load %arg5[%c11_155, %c0_156] : memref<32x128xf32, #tpu.memory_space<vmem>>, vector<1x128xf32>
    tpu.vector_store %arg5[%c11_155, %c0_156], %227 {strides = array<i32>} : memref<32x128xf32, #tpu.memory_space<vmem>>, vector<1x128xf32>,
    %cst_157 = arith.constant 1.200000e+01 : f32
    %229 = vector.broadcast %cst_157 : f32 to vector<8x128xf32>
    %230 = arith.cmpf oeq, %36, %229 : vector<8x128xf32>
    %cst_158 = arith.constant 1.000000e+00 : f32
    %cst_159 = arith.constant 0.000000e+00 : f32
    %231 = vector.broadcast %cst_158 : f32 to vector<8x128xf32>
    %232 = vector.broadcast %cst_159 : f32 to vector<8x128xf32>
    %233 = arith.select %230, %231, %232 : vector<8x128xi1>, vector<8x128xf32>
    %cst_160 = arith.constant dense<0.000000e+00> : vector<128xf32>
    %234 = vector.multi_reduction <add>, %233, %cst_160 [0] : vector<8x128xf32> to vector<128xf32>
    %235 = vector.shape_cast %234 : vector<128xf32> to vector<1x128xf32>
    %236 = arith.mulf %233, %27 : vector<8x128xf32>
    %cst_161 = arith.constant dense<0.000000e+00> : vector<128xf32>
    %237 = vector.multi_reduction <add>, %236, %cst_161 [0] : vector<8x128xf32> to vector<128xf32>
    %238 = vector.shape_cast %237 : vector<128xf32> to vector<1x128xf32>
    %c12 = arith.constant 12 : index
    %c0_162 = arith.constant 0 : index
    %239 = vector.load %arg4[%c12, %c0_162] : memref<32x128xf32, #tpu.memory_space<vmem>>, vector<1x128xf32>
    %240 = arith.addf %239, %235 : vector<1x128xf32>
    %c12_163 = arith.constant 12 : index
    %c0_164 = arith.constant 0 : index
    %241 = vector.load %arg4[%c12_163, %c0_164] : memref<32x128xf32, #tpu.memory_space<vmem>>, vector<1x128xf32>
    tpu.vector_store %arg4[%c12_163, %c0_164], %240 {strides = array<i32>} : memref<32x128xf32, #tpu.memory_space<vmem>>, vector<1x128xf32>,
    %c12_165 = arith.constant 12 : index
    %c0_166 = arith.constant 0 : index
    %242 = vector.load %arg5[%c12_165, %c0_166] : memref<32x128xf32, #tpu.memory_space<vmem>>, vector<1x128xf32>
    %243 = arith.addf %242, %238 : vector<1x128xf32>
    %c12_167 = arith.constant 12 : index
    %c0_168 = arith.constant 0 : index
    %244 = vector.load %arg5[%c12_167, %c0_168] : memref<32x128xf32, #tpu.memory_space<vmem>>, vector<1x128xf32>
    tpu.vector_store %arg5[%c12_167, %c0_168], %243 {strides = array<i32>} : memref<32x128xf32, #tpu.memory_space<vmem>>, vector<1x128xf32>,
    %cst_169 = arith.constant 1.300000e+01 : f32
    %245 = vector.broadcast %cst_169 : f32 to vector<8x128xf32>
    %246 = arith.cmpf oeq, %36, %245 : vector<8x128xf32>
    %cst_170 = arith.constant 1.000000e+00 : f32
    %cst_171 = arith.constant 0.000000e+00 : f32
    %247 = vector.broadcast %cst_170 : f32 to vector<8x128xf32>
    %248 = vector.broadcast %cst_171 : f32 to vector<8x128xf32>
    %249 = arith.select %246, %247, %248 : vector<8x128xi1>, vector<8x128xf32>
    %cst_172 = arith.constant dense<0.000000e+00> : vector<128xf32>
    %250 = vector.multi_reduction <add>, %249, %cst_172 [0] : vector<8x128xf32> to vector<128xf32>
    %251 = vector.shape_cast %250 : vector<128xf32> to vector<1x128xf32>
    %252 = arith.mulf %249, %27 : vector<8x128xf32>
    %cst_173 = arith.constant dense<0.000000e+00> : vector<128xf32>
    %253 = vector.multi_reduction <add>, %252, %cst_173 [0] : vector<8x128xf32> to vector<128xf32>
    %254 = vector.shape_cast %253 : vector<128xf32> to vector<1x128xf32>
    %c13 = arith.constant 13 : index
    %c0_174 = arith.constant 0 : index
    %255 = vector.load %arg4[%c13, %c0_174] : memref<32x128xf32, #tpu.memory_space<vmem>>, vector<1x128xf32>
    %256 = arith.addf %255, %251 : vector<1x128xf32>
    %c13_175 = arith.constant 13 : index
    %c0_176 = arith.constant 0 : index
    %257 = vector.load %arg4[%c13_175, %c0_176] : memref<32x128xf32, #tpu.memory_space<vmem>>, vector<1x128xf32>
    tpu.vector_store %arg4[%c13_175, %c0_176], %256 {strides = array<i32>} : memref<32x128xf32, #tpu.memory_space<vmem>>, vector<1x128xf32>,
    %c13_177 = arith.constant 13 : index
    %c0_178 = arith.constant 0 : index
    %258 = vector.load %arg5[%c13_177, %c0_178] : memref<32x128xf32, #tpu.memory_space<vmem>>, vector<1x128xf32>
    %259 = arith.addf %258, %254 : vector<1x128xf32>
    %c13_179 = arith.constant 13 : index
    %c0_180 = arith.constant 0 : index
    %260 = vector.load %arg5[%c13_179, %c0_180] : memref<32x128xf32, #tpu.memory_space<vmem>>, vector<1x128xf32>
    tpu.vector_store %arg5[%c13_179, %c0_180], %259 {strides = array<i32>} : memref<32x128xf32, #tpu.memory_space<vmem>>, vector<1x128xf32>,
    %cst_181 = arith.constant 1.400000e+01 : f32
    %261 = vector.broadcast %cst_181 : f32 to vector<8x128xf32>
    %262 = arith.cmpf oeq, %36, %261 : vector<8x128xf32>
    %cst_182 = arith.constant 1.000000e+00 : f32
    %cst_183 = arith.constant 0.000000e+00 : f32
    %263 = vector.broadcast %cst_182 : f32 to vector<8x128xf32>
    %264 = vector.broadcast %cst_183 : f32 to vector<8x128xf32>
    %265 = arith.select %262, %263, %264 : vector<8x128xi1>, vector<8x128xf32>
    %cst_184 = arith.constant dense<0.000000e+00> : vector<128xf32>
    %266 = vector.multi_reduction <add>, %265, %cst_184 [0] : vector<8x128xf32> to vector<128xf32>
    %267 = vector.shape_cast %266 : vector<128xf32> to vector<1x128xf32>
    %268 = arith.mulf %265, %27 : vector<8x128xf32>
    %cst_185 = arith.constant dense<0.000000e+00> : vector<128xf32>
    %269 = vector.multi_reduction <add>, %268, %cst_185 [0] : vector<8x128xf32> to vector<128xf32>
    %270 = vector.shape_cast %269 : vector<128xf32> to vector<1x128xf32>
    %c14 = arith.constant 14 : index
    %c0_186 = arith.constant 0 : index
    %271 = vector.load %arg4[%c14, %c0_186] : memref<32x128xf32, #tpu.memory_space<vmem>>, vector<1x128xf32>
    %272 = arith.addf %271, %267 : vector<1x128xf32>
    %c14_187 = arith.constant 14 : index
    %c0_188 = arith.constant 0 : index
    %273 = vector.load %arg4[%c14_187, %c0_188] : memref<32x128xf32, #tpu.memory_space<vmem>>, vector<1x128xf32>
    tpu.vector_store %arg4[%c14_187, %c0_188], %272 {strides = array<i32>} : memref<32x128xf32, #tpu.memory_space<vmem>>, vector<1x128xf32>,
    %c14_189 = arith.constant 14 : index
    %c0_190 = arith.constant 0 : index
    %274 = vector.load %arg5[%c14_189, %c0_190] : memref<32x128xf32, #tpu.memory_space<vmem>>, vector<1x128xf32>
    %275 = arith.addf %274, %270 : vector<1x128xf32>
    %c14_191 = arith.constant 14 : index
    %c0_192 = arith.constant 0 : index
    %276 = vector.load %arg5[%c14_191, %c0_192] : memref<32x128xf32, #tpu.memory_space<vmem>>, vector<1x128xf32>
    tpu.vector_store %arg5[%c14_191, %c0_192], %275 {strides = array<i32>} : memref<32x128xf32, #tpu.memory_space<vmem>>, vector<1x128xf32>,
    %cst_193 = arith.constant 1.500000e+01 : f32
    %277 = vector.broadcast %cst_193 : f32 to vector<8x128xf32>
    %278 = arith.cmpf oeq, %36, %277 : vector<8x128xf32>
    %cst_194 = arith.constant 1.000000e+00 : f32
    %cst_195 = arith.constant 0.000000e+00 : f32
    %279 = vector.broadcast %cst_194 : f32 to vector<8x128xf32>
    %280 = vector.broadcast %cst_195 : f32 to vector<8x128xf32>
    %281 = arith.select %278, %279, %280 : vector<8x128xi1>, vector<8x128xf32>
    %cst_196 = arith.constant dense<0.000000e+00> : vector<128xf32>
    %282 = vector.multi_reduction <add>, %281, %cst_196 [0] : vector<8x128xf32> to vector<128xf32>
    %283 = vector.shape_cast %282 : vector<128xf32> to vector<1x128xf32>
    %284 = arith.mulf %281, %27 : vector<8x128xf32>
    %cst_197 = arith.constant dense<0.000000e+00> : vector<128xf32>
    %285 = vector.multi_reduction <add>, %284, %cst_197 [0] : vector<8x128xf32> to vector<128xf32>
    %286 = vector.shape_cast %285 : vector<128xf32> to vector<1x128xf32>
    %c15 = arith.constant 15 : index
    %c0_198 = arith.constant 0 : index
    %287 = vector.load %arg4[%c15, %c0_198] : memref<32x128xf32, #tpu.memory_space<vmem>>, vector<1x128xf32>
    %288 = arith.addf %287, %283 : vector<1x128xf32>
    %c15_199 = arith.constant 15 : index
    %c0_200 = arith.constant 0 : index
    %289 = vector.load %arg4[%c15_199, %c0_200] : memref<32x128xf32, #tpu.memory_space<vmem>>, vector<1x128xf32>
    tpu.vector_store %arg4[%c15_199, %c0_200], %288 {strides = array<i32>} : memref<32x128xf32, #tpu.memory_space<vmem>>, vector<1x128xf32>,
    %c15_201 = arith.constant 15 : index
    %c0_202 = arith.constant 0 : index
    %290 = vector.load %arg5[%c15_201, %c0_202] : memref<32x128xf32, #tpu.memory_space<vmem>>, vector<1x128xf32>
    %291 = arith.addf %290, %286 : vector<1x128xf32>
    %c15_203 = arith.constant 15 : index
    %c0_204 = arith.constant 0 : index
    %292 = vector.load %arg5[%c15_203, %c0_204] : memref<32x128xf32, #tpu.memory_space<vmem>>, vector<1x128xf32>
    tpu.vector_store %arg5[%c15_203, %c0_204], %291 {strides = array<i32>} : memref<32x128xf32, #tpu.memory_space<vmem>>, vector<1x128xf32>,
    %cst_205 = arith.constant 1.600000e+01 : f32
    %293 = vector.broadcast %cst_205 : f32 to vector<8x128xf32>
    %294 = arith.cmpf oeq, %36, %293 : vector<8x128xf32>
    %cst_206 = arith.constant 1.000000e+00 : f32
    %cst_207 = arith.constant 0.000000e+00 : f32
    %295 = vector.broadcast %cst_206 : f32 to vector<8x128xf32>
    %296 = vector.broadcast %cst_207 : f32 to vector<8x128xf32>
    %297 = arith.select %294, %295, %296 : vector<8x128xi1>, vector<8x128xf32>
    %cst_208 = arith.constant dense<0.000000e+00> : vector<128xf32>
    %298 = vector.multi_reduction <add>, %297, %cst_208 [0] : vector<8x128xf32> to vector<128xf32>
    %299 = vector.shape_cast %298 : vector<128xf32> to vector<1x128xf32>
    %300 = arith.mulf %297, %27 : vector<8x128xf32>
    %cst_209 = arith.constant dense<0.000000e+00> : vector<128xf32>
    %301 = vector.multi_reduction <add>, %300, %cst_209 [0] : vector<8x128xf32> to vector<128xf32>
    %302 = vector.shape_cast %301 : vector<128xf32> to vector<1x128xf32>
    %c16 = arith.constant 16 : index
    %c0_210 = arith.constant 0 : index
    %303 = vector.load %arg4[%c16, %c0_210] : memref<32x128xf32, #tpu.memory_space<vmem>>, vector<1x128xf32>
    %304 = arith.addf %303, %299 : vector<1x128xf32>
    %c16_211 = arith.constant 16 : index
    %c0_212 = arith.constant 0 : index
    %305 = vector.load %arg4[%c16_211, %c0_212] : memref<32x128xf32, #tpu.memory_space<vmem>>, vector<1x128xf32>
    tpu.vector_store %arg4[%c16_211, %c0_212], %304 {strides = array<i32>} : memref<32x128xf32, #tpu.memory_space<vmem>>, vector<1x128xf32>,
    %c16_213 = arith.constant 16 : index
    %c0_214 = arith.constant 0 : index
    %306 = vector.load %arg5[%c16_213, %c0_214] : memref<32x128xf32, #tpu.memory_space<vmem>>, vector<1x128xf32>
    %307 = arith.addf %306, %302 : vector<1x128xf32>
    %c16_215 = arith.constant 16 : index
    %c0_216 = arith.constant 0 : index
    %308 = vector.load %arg5[%c16_215, %c0_216] : memref<32x128xf32, #tpu.memory_space<vmem>>, vector<1x128xf32>
    tpu.vector_store %arg5[%c16_215, %c0_216], %307 {strides = array<i32>} : memref<32x128xf32, #tpu.memory_space<vmem>>, vector<1x128xf32>,
    %cst_217 = arith.constant 1.700000e+01 : f32
    %309 = vector.broadcast %cst_217 : f32 to vector<8x128xf32>
    %310 = arith.cmpf oeq, %36, %309 : vector<8x128xf32>
    %cst_218 = arith.constant 1.000000e+00 : f32
    %cst_219 = arith.constant 0.000000e+00 : f32
    %311 = vector.broadcast %cst_218 : f32 to vector<8x128xf32>
    %312 = vector.broadcast %cst_219 : f32 to vector<8x128xf32>
    %313 = arith.select %310, %311, %312 : vector<8x128xi1>, vector<8x128xf32>
    %cst_220 = arith.constant dense<0.000000e+00> : vector<128xf32>
    %314 = vector.multi_reduction <add>, %313, %cst_220 [0] : vector<8x128xf32> to vector<128xf32>
    %315 = vector.shape_cast %314 : vector<128xf32> to vector<1x128xf32>
    %316 = arith.mulf %313, %27 : vector<8x128xf32>
    %cst_221 = arith.constant dense<0.000000e+00> : vector<128xf32>
    %317 = vector.multi_reduction <add>, %316, %cst_221 [0] : vector<8x128xf32> to vector<128xf32>
    %318 = vector.shape_cast %317 : vector<128xf32> to vector<1x128xf32>
    %c17 = arith.constant 17 : index
    %c0_222 = arith.constant 0 : index
    %319 = vector.load %arg4[%c17, %c0_222] : memref<32x128xf32, #tpu.memory_space<vmem>>, vector<1x128xf32>
    %320 = arith.addf %319, %315 : vector<1x128xf32>
    %c17_223 = arith.constant 17 : index
    %c0_224 = arith.constant 0 : index
    %321 = vector.load %arg4[%c17_223, %c0_224] : memref<32x128xf32, #tpu.memory_space<vmem>>, vector<1x128xf32>
    tpu.vector_store %arg4[%c17_223, %c0_224], %320 {strides = array<i32>} : memref<32x128xf32, #tpu.memory_space<vmem>>, vector<1x128xf32>,
    %c17_225 = arith.constant 17 : index
    %c0_226 = arith.constant 0 : index
    %322 = vector.load %arg5[%c17_225, %c0_226] : memref<32x128xf32, #tpu.memory_space<vmem>>, vector<1x128xf32>
    %323 = arith.addf %322, %318 : vector<1x128xf32>
    %c17_227 = arith.constant 17 : index
    %c0_228 = arith.constant 0 : index
    %324 = vector.load %arg5[%c17_227, %c0_228] : memref<32x128xf32, #tpu.memory_space<vmem>>, vector<1x128xf32>
    tpu.vector_store %arg5[%c17_227, %c0_228], %323 {strides = array<i32>} : memref<32x128xf32, #tpu.memory_space<vmem>>, vector<1x128xf32>,
    %cst_229 = arith.constant 1.800000e+01 : f32
    %325 = vector.broadcast %cst_229 : f32 to vector<8x128xf32>
    %326 = arith.cmpf oeq, %36, %325 : vector<8x128xf32>
    %cst_230 = arith.constant 1.000000e+00 : f32
    %cst_231 = arith.constant 0.000000e+00 : f32
    %327 = vector.broadcast %cst_230 : f32 to vector<8x128xf32>
    %328 = vector.broadcast %cst_231 : f32 to vector<8x128xf32>
    %329 = arith.select %326, %327, %328 : vector<8x128xi1>, vector<8x128xf32>
    %cst_232 = arith.constant dense<0.000000e+00> : vector<128xf32>
    %330 = vector.multi_reduction <add>, %329, %cst_232 [0] : vector<8x128xf32> to vector<128xf32>
    %331 = vector.shape_cast %330 : vector<128xf32> to vector<1x128xf32>
    %332 = arith.mulf %329, %27 : vector<8x128xf32>
    %cst_233 = arith.constant dense<0.000000e+00> : vector<128xf32>
    %333 = vector.multi_reduction <add>, %332, %cst_233 [0] : vector<8x128xf32> to vector<128xf32>
    %334 = vector.shape_cast %333 : vector<128xf32> to vector<1x128xf32>
    %c18 = arith.constant 18 : index
    %c0_234 = arith.constant 0 : index
    %335 = vector.load %arg4[%c18, %c0_234] : memref<32x128xf32, #tpu.memory_space<vmem>>, vector<1x128xf32>
    %336 = arith.addf %335, %331 : vector<1x128xf32>
    %c18_235 = arith.constant 18 : index
    %c0_236 = arith.constant 0 : index
    %337 = vector.load %arg4[%c18_235, %c0_236] : memref<32x128xf32, #tpu.memory_space<vmem>>, vector<1x128xf32>
    tpu.vector_store %arg4[%c18_235, %c0_236], %336 {strides = array<i32>} : memref<32x128xf32, #tpu.memory_space<vmem>>, vector<1x128xf32>,
    %c18_237 = arith.constant 18 : index
    %c0_238 = arith.constant 0 : index
    %338 = vector.load %arg5[%c18_237, %c0_238] : memref<32x128xf32, #tpu.memory_space<vmem>>, vector<1x128xf32>
    %339 = arith.addf %338, %334 : vector<1x128xf32>
    %c18_239 = arith.constant 18 : index
    %c0_240 = arith.constant 0 : index
    %340 = vector.load %arg5[%c18_239, %c0_240] : memref<32x128xf32, #tpu.memory_space<vmem>>, vector<1x128xf32>
    tpu.vector_store %arg5[%c18_239, %c0_240], %339 {strides = array<i32>} : memref<32x128xf32, #tpu.memory_space<vmem>>, vector<1x128xf32>,
    %cst_241 = arith.constant 1.900000e+01 : f32
    %341 = vector.broadcast %cst_241 : f32 to vector<8x128xf32>
    %342 = arith.cmpf oeq, %36, %341 : vector<8x128xf32>
    %cst_242 = arith.constant 1.000000e+00 : f32
    %cst_243 = arith.constant 0.000000e+00 : f32
    %343 = vector.broadcast %cst_242 : f32 to vector<8x128xf32>
    %344 = vector.broadcast %cst_243 : f32 to vector<8x128xf32>
    %345 = arith.select %342, %343, %344 : vector<8x128xi1>, vector<8x128xf32>
    %cst_244 = arith.constant dense<0.000000e+00> : vector<128xf32>
    %346 = vector.multi_reduction <add>, %345, %cst_244 [0] : vector<8x128xf32> to vector<128xf32>
    %347 = vector.shape_cast %346 : vector<128xf32> to vector<1x128xf32>
    %348 = arith.mulf %345, %27 : vector<8x128xf32>
    %cst_245 = arith.constant dense<0.000000e+00> : vector<128xf32>
    %349 = vector.multi_reduction <add>, %348, %cst_245 [0] : vector<8x128xf32> to vector<128xf32>
    %350 = vector.shape_cast %349 : vector<128xf32> to vector<1x128xf32>
    %c19 = arith.constant 19 : index
    %c0_246 = arith.constant 0 : index
    %351 = vector.load %arg4[%c19, %c0_246] : memref<32x128xf32, #tpu.memory_space<vmem>>, vector<1x128xf32>
    %352 = arith.addf %351, %347 : vector<1x128xf32>
    %c19_247 = arith.constant 19 : index
    %c0_248 = arith.constant 0 : index
    %353 = vector.load %arg4[%c19_247, %c0_248] : memref<32x128xf32, #tpu.memory_space<vmem>>, vector<1x128xf32>
    tpu.vector_store %arg4[%c19_247, %c0_248], %352 {strides = array<i32>} : memref<32x128xf32, #tpu.memory_space<vmem>>, vector<1x128xf32>,
    %c19_249 = arith.constant 19 : index
    %c0_250 = arith.constant 0 : index
    %354 = vector.load %arg5[%c19_249, %c0_250] : memref<32x128xf32, #tpu.memory_space<vmem>>, vector<1x128xf32>
    %355 = arith.addf %354, %350 : vector<1x128xf32>
    %c19_251 = arith.constant 19 : index
    %c0_252 = arith.constant 0 : index
    %356 = vector.load %arg5[%c19_251, %c0_252] : memref<32x128xf32, #tpu.memory_space<vmem>>, vector<1x128xf32>
    tpu.vector_store %arg5[%c19_251, %c0_252], %355 {strides = array<i32>} : memref<32x128xf32, #tpu.memory_space<vmem>>, vector<1x128xf32>,
    %cst_253 = arith.constant 2.000000e+01 : f32
    %357 = vector.broadcast %cst_253 : f32 to vector<8x128xf32>
    %358 = arith.cmpf oeq, %36, %357 : vector<8x128xf32>
    %cst_254 = arith.constant 1.000000e+00 : f32
    %cst_255 = arith.constant 0.000000e+00 : f32
    %359 = vector.broadcast %cst_254 : f32 to vector<8x128xf32>
    %360 = vector.broadcast %cst_255 : f32 to vector<8x128xf32>
    %361 = arith.select %358, %359, %360 : vector<8x128xi1>, vector<8x128xf32>
    %cst_256 = arith.constant dense<0.000000e+00> : vector<128xf32>
    %362 = vector.multi_reduction <add>, %361, %cst_256 [0] : vector<8x128xf32> to vector<128xf32>
    %363 = vector.shape_cast %362 : vector<128xf32> to vector<1x128xf32>
    %364 = arith.mulf %361, %27 : vector<8x128xf32>
    %cst_257 = arith.constant dense<0.000000e+00> : vector<128xf32>
    %365 = vector.multi_reduction <add>, %364, %cst_257 [0] : vector<8x128xf32> to vector<128xf32>
    %366 = vector.shape_cast %365 : vector<128xf32> to vector<1x128xf32>
    %c20 = arith.constant 20 : index
    %c0_258 = arith.constant 0 : index
    %367 = vector.load %arg4[%c20, %c0_258] : memref<32x128xf32, #tpu.memory_space<vmem>>, vector<1x128xf32>
    %368 = arith.addf %367, %363 : vector<1x128xf32>
    %c20_259 = arith.constant 20 : index
    %c0_260 = arith.constant 0 : index
    %369 = vector.load %arg4[%c20_259, %c0_260] : memref<32x128xf32, #tpu.memory_space<vmem>>, vector<1x128xf32>
    tpu.vector_store %arg4[%c20_259, %c0_260], %368 {strides = array<i32>} : memref<32x128xf32, #tpu.memory_space<vmem>>, vector<1x128xf32>,
    %c20_261 = arith.constant 20 : index
    %c0_262 = arith.constant 0 : index
    %370 = vector.load %arg5[%c20_261, %c0_262] : memref<32x128xf32, #tpu.memory_space<vmem>>, vector<1x128xf32>
    %371 = arith.addf %370, %366 : vector<1x128xf32>
    %c20_263 = arith.constant 20 : index
    %c0_264 = arith.constant 0 : index
    %372 = vector.load %arg5[%c20_263, %c0_264] : memref<32x128xf32, #tpu.memory_space<vmem>>, vector<1x128xf32>
    tpu.vector_store %arg5[%c20_263, %c0_264], %371 {strides = array<i32>} : memref<32x128xf32, #tpu.memory_space<vmem>>, vector<1x128xf32>,
    %cst_265 = arith.constant 2.100000e+01 : f32
    %373 = vector.broadcast %cst_265 : f32 to vector<8x128xf32>
    %374 = arith.cmpf oeq, %36, %373 : vector<8x128xf32>
    %cst_266 = arith.constant 1.000000e+00 : f32
    %cst_267 = arith.constant 0.000000e+00 : f32
    %375 = vector.broadcast %cst_266 : f32 to vector<8x128xf32>
    %376 = vector.broadcast %cst_267 : f32 to vector<8x128xf32>
    %377 = arith.select %374, %375, %376 : vector<8x128xi1>, vector<8x128xf32>
    %cst_268 = arith.constant dense<0.000000e+00> : vector<128xf32>
    %378 = vector.multi_reduction <add>, %377, %cst_268 [0] : vector<8x128xf32> to vector<128xf32>
    %379 = vector.shape_cast %378 : vector<128xf32> to vector<1x128xf32>
    %380 = arith.mulf %377, %27 : vector<8x128xf32>
    %cst_269 = arith.constant dense<0.000000e+00> : vector<128xf32>
    %381 = vector.multi_reduction <add>, %380, %cst_269 [0] : vector<8x128xf32> to vector<128xf32>
    %382 = vector.shape_cast %381 : vector<128xf32> to vector<1x128xf32>
    %c21 = arith.constant 21 : index
    %c0_270 = arith.constant 0 : index
    %383 = vector.load %arg4[%c21, %c0_270] : memref<32x128xf32, #tpu.memory_space<vmem>>, vector<1x128xf32>
    %384 = arith.addf %383, %379 : vector<1x128xf32>
    %c21_271 = arith.constant 21 : index
    %c0_272 = arith.constant 0 : index
    %385 = vector.load %arg4[%c21_271, %c0_272] : memref<32x128xf32, #tpu.memory_space<vmem>>, vector<1x128xf32>
    tpu.vector_store %arg4[%c21_271, %c0_272], %384 {strides = array<i32>} : memref<32x128xf32, #tpu.memory_space<vmem>>, vector<1x128xf32>,
    %c21_273 = arith.constant 21 : index
    %c0_274 = arith.constant 0 : index
    %386 = vector.load %arg5[%c21_273, %c0_274] : memref<32x128xf32, #tpu.memory_space<vmem>>, vector<1x128xf32>
    %387 = arith.addf %386, %382 : vector<1x128xf32>
    %c21_275 = arith.constant 21 : index
    %c0_276 = arith.constant 0 : index
    %388 = vector.load %arg5[%c21_275, %c0_276] : memref<32x128xf32, #tpu.memory_space<vmem>>, vector<1x128xf32>
    tpu.vector_store %arg5[%c21_275, %c0_276], %387 {strides = array<i32>} : memref<32x128xf32, #tpu.memory_space<vmem>>, vector<1x128xf32>,
    %cst_277 = arith.constant 2.200000e+01 : f32
    %389 = vector.broadcast %cst_277 : f32 to vector<8x128xf32>
    %390 = arith.cmpf oeq, %36, %389 : vector<8x128xf32>
    %cst_278 = arith.constant 1.000000e+00 : f32
    %cst_279 = arith.constant 0.000000e+00 : f32
    %391 = vector.broadcast %cst_278 : f32 to vector<8x128xf32>
    %392 = vector.broadcast %cst_279 : f32 to vector<8x128xf32>
    %393 = arith.select %390, %391, %392 : vector<8x128xi1>, vector<8x128xf32>
    %cst_280 = arith.constant dense<0.000000e+00> : vector<128xf32>
    %394 = vector.multi_reduction <add>, %393, %cst_280 [0] : vector<8x128xf32> to vector<128xf32>
    %395 = vector.shape_cast %394 : vector<128xf32> to vector<1x128xf32>
    %396 = arith.mulf %393, %27 : vector<8x128xf32>
    %cst_281 = arith.constant dense<0.000000e+00> : vector<128xf32>
    %397 = vector.multi_reduction <add>, %396, %cst_281 [0] : vector<8x128xf32> to vector<128xf32>
    %398 = vector.shape_cast %397 : vector<128xf32> to vector<1x128xf32>
    %c22 = arith.constant 22 : index
    %c0_282 = arith.constant 0 : index
    %399 = vector.load %arg4[%c22, %c0_282] : memref<32x128xf32, #tpu.memory_space<vmem>>, vector<1x128xf32>
    %400 = arith.addf %399, %395 : vector<1x128xf32>
    %c22_283 = arith.constant 22 : index
    %c0_284 = arith.constant 0 : index
    %401 = vector.load %arg4[%c22_283, %c0_284] : memref<32x128xf32, #tpu.memory_space<vmem>>, vector<1x128xf32>
    tpu.vector_store %arg4[%c22_283, %c0_284], %400 {strides = array<i32>} : memref<32x128xf32, #tpu.memory_space<vmem>>, vector<1x128xf32>,
    %c22_285 = arith.constant 22 : index
    %c0_286 = arith.constant 0 : index
    %402 = vector.load %arg5[%c22_285, %c0_286] : memref<32x128xf32, #tpu.memory_space<vmem>>, vector<1x128xf32>
    %403 = arith.addf %402, %398 : vector<1x128xf32>
    %c22_287 = arith.constant 22 : index
    %c0_288 = arith.constant 0 : index
    %404 = vector.load %arg5[%c22_287, %c0_288] : memref<32x128xf32, #tpu.memory_space<vmem>>, vector<1x128xf32>
    tpu.vector_store %arg5[%c22_287, %c0_288], %403 {strides = array<i32>} : memref<32x128xf32, #tpu.memory_space<vmem>>, vector<1x128xf32>,
    %cst_289 = arith.constant 2.300000e+01 : f32
    %405 = vector.broadcast %cst_289 : f32 to vector<8x128xf32>
    %406 = arith.cmpf oeq, %36, %405 : vector<8x128xf32>
    %cst_290 = arith.constant 1.000000e+00 : f32
    %cst_291 = arith.constant 0.000000e+00 : f32
    %407 = vector.broadcast %cst_290 : f32 to vector<8x128xf32>
    %408 = vector.broadcast %cst_291 : f32 to vector<8x128xf32>
    %409 = arith.select %406, %407, %408 : vector<8x128xi1>, vector<8x128xf32>
    %cst_292 = arith.constant dense<0.000000e+00> : vector<128xf32>
    %410 = vector.multi_reduction <add>, %409, %cst_292 [0] : vector<8x128xf32> to vector<128xf32>
    %411 = vector.shape_cast %410 : vector<128xf32> to vector<1x128xf32>
    %412 = arith.mulf %409, %27 : vector<8x128xf32>
    %cst_293 = arith.constant dense<0.000000e+00> : vector<128xf32>
    %413 = vector.multi_reduction <add>, %412, %cst_293 [0] : vector<8x128xf32> to vector<128xf32>
    %414 = vector.shape_cast %413 : vector<128xf32> to vector<1x128xf32>
    %c23 = arith.constant 23 : index
    %c0_294 = arith.constant 0 : index
    %415 = vector.load %arg4[%c23, %c0_294] : memref<32x128xf32, #tpu.memory_space<vmem>>, vector<1x128xf32>
    %416 = arith.addf %415, %411 : vector<1x128xf32>
    %c23_295 = arith.constant 23 : index
    %c0_296 = arith.constant 0 : index
    %417 = vector.load %arg4[%c23_295, %c0_296] : memref<32x128xf32, #tpu.memory_space<vmem>>, vector<1x128xf32>
    tpu.vector_store %arg4[%c23_295, %c0_296], %416 {strides = array<i32>} : memref<32x128xf32, #tpu.memory_space<vmem>>, vector<1x128xf32>,
    %c23_297 = arith.constant 23 : index
    %c0_298 = arith.constant 0 : index
    %418 = vector.load %arg5[%c23_297, %c0_298] : memref<32x128xf32, #tpu.memory_space<vmem>>, vector<1x128xf32>
    %419 = arith.addf %418, %414 : vector<1x128xf32>
    %c23_299 = arith.constant 23 : index
    %c0_300 = arith.constant 0 : index
    %420 = vector.load %arg5[%c23_299, %c0_300] : memref<32x128xf32, #tpu.memory_space<vmem>>, vector<1x128xf32>
    tpu.vector_store %arg5[%c23_299, %c0_300], %419 {strides = array<i32>} : memref<32x128xf32, #tpu.memory_space<vmem>>, vector<1x128xf32>,
    %cst_301 = arith.constant 2.400000e+01 : f32
    %421 = vector.broadcast %cst_301 : f32 to vector<8x128xf32>
    %422 = arith.cmpf oeq, %36, %421 : vector<8x128xf32>
    %cst_302 = arith.constant 1.000000e+00 : f32
    %cst_303 = arith.constant 0.000000e+00 : f32
    %423 = vector.broadcast %cst_302 : f32 to vector<8x128xf32>
    %424 = vector.broadcast %cst_303 : f32 to vector<8x128xf32>
    %425 = arith.select %422, %423, %424 : vector<8x128xi1>, vector<8x128xf32>
    %cst_304 = arith.constant dense<0.000000e+00> : vector<128xf32>
    %426 = vector.multi_reduction <add>, %425, %cst_304 [0] : vector<8x128xf32> to vector<128xf32>
    %427 = vector.shape_cast %426 : vector<128xf32> to vector<1x128xf32>
    %428 = arith.mulf %425, %27 : vector<8x128xf32>
    %cst_305 = arith.constant dense<0.000000e+00> : vector<128xf32>
    %429 = vector.multi_reduction <add>, %428, %cst_305 [0] : vector<8x128xf32> to vector<128xf32>
    %430 = vector.shape_cast %429 : vector<128xf32> to vector<1x128xf32>
    %c24 = arith.constant 24 : index
    %c0_306 = arith.constant 0 : index
    %431 = vector.load %arg4[%c24, %c0_306] : memref<32x128xf32, #tpu.memory_space<vmem>>, vector<1x128xf32>
    %432 = arith.addf %431, %427 : vector<1x128xf32>
    %c24_307 = arith.constant 24 : index
    %c0_308 = arith.constant 0 : index
    %433 = vector.load %arg4[%c24_307, %c0_308] : memref<32x128xf32, #tpu.memory_space<vmem>>, vector<1x128xf32>
    tpu.vector_store %arg4[%c24_307, %c0_308], %432 {strides = array<i32>} : memref<32x128xf32, #tpu.memory_space<vmem>>, vector<1x128xf32>,
    %c24_309 = arith.constant 24 : index
    %c0_310 = arith.constant 0 : index
    %434 = vector.load %arg5[%c24_309, %c0_310] : memref<32x128xf32, #tpu.memory_space<vmem>>, vector<1x128xf32>
    %435 = arith.addf %434, %430 : vector<1x128xf32>
    %c24_311 = arith.constant 24 : index
    %c0_312 = arith.constant 0 : index
    %436 = vector.load %arg5[%c24_311, %c0_312] : memref<32x128xf32, #tpu.memory_space<vmem>>, vector<1x128xf32>
    tpu.vector_store %arg5[%c24_311, %c0_312], %435 {strides = array<i32>} : memref<32x128xf32, #tpu.memory_space<vmem>>, vector<1x128xf32>,
    %cst_313 = arith.constant 2.500000e+01 : f32
    %437 = vector.broadcast %cst_313 : f32 to vector<8x128xf32>
    %438 = arith.cmpf oeq, %36, %437 : vector<8x128xf32>
    %cst_314 = arith.constant 1.000000e+00 : f32
    %cst_315 = arith.constant 0.000000e+00 : f32
    %439 = vector.broadcast %cst_314 : f32 to vector<8x128xf32>
    %440 = vector.broadcast %cst_315 : f32 to vector<8x128xf32>
    %441 = arith.select %438, %439, %440 : vector<8x128xi1>, vector<8x128xf32>
    %cst_316 = arith.constant dense<0.000000e+00> : vector<128xf32>
    %442 = vector.multi_reduction <add>, %441, %cst_316 [0] : vector<8x128xf32> to vector<128xf32>
    %443 = vector.shape_cast %442 : vector<128xf32> to vector<1x128xf32>
    %444 = arith.mulf %441, %27 : vector<8x128xf32>
    %cst_317 = arith.constant dense<0.000000e+00> : vector<128xf32>
    %445 = vector.multi_reduction <add>, %444, %cst_317 [0] : vector<8x128xf32> to vector<128xf32>
    %446 = vector.shape_cast %445 : vector<128xf32> to vector<1x128xf32>
    %c25 = arith.constant 25 : index
    %c0_318 = arith.constant 0 : index
    %447 = vector.load %arg4[%c25, %c0_318] : memref<32x128xf32, #tpu.memory_space<vmem>>, vector<1x128xf32>
    %448 = arith.addf %447, %443 : vector<1x128xf32>
    %c25_319 = arith.constant 25 : index
    %c0_320 = arith.constant 0 : index
    %449 = vector.load %arg4[%c25_319, %c0_320] : memref<32x128xf32, #tpu.memory_space<vmem>>, vector<1x128xf32>
    tpu.vector_store %arg4[%c25_319, %c0_320], %448 {strides = array<i32>} : memref<32x128xf32, #tpu.memory_space<vmem>>, vector<1x128xf32>,
    %c25_321 = arith.constant 25 : index
    %c0_322 = arith.constant 0 : index
    %450 = vector.load %arg5[%c25_321, %c0_322] : memref<32x128xf32, #tpu.memory_space<vmem>>, vector<1x128xf32>
    %451 = arith.addf %450, %446 : vector<1x128xf32>
    %c25_323 = arith.constant 25 : index
    %c0_324 = arith.constant 0 : index
    %452 = vector.load %arg5[%c25_323, %c0_324] : memref<32x128xf32, #tpu.memory_space<vmem>>, vector<1x128xf32>
    tpu.vector_store %arg5[%c25_323, %c0_324], %451 {strides = array<i32>} : memref<32x128xf32, #tpu.memory_space<vmem>>, vector<1x128xf32>,
    %cst_325 = arith.constant 2.600000e+01 : f32
    %453 = vector.broadcast %cst_325 : f32 to vector<8x128xf32>
    %454 = arith.cmpf oeq, %36, %453 : vector<8x128xf32>
    %cst_326 = arith.constant 1.000000e+00 : f32
    %cst_327 = arith.constant 0.000000e+00 : f32
    %455 = vector.broadcast %cst_326 : f32 to vector<8x128xf32>
    %456 = vector.broadcast %cst_327 : f32 to vector<8x128xf32>
    %457 = arith.select %454, %455, %456 : vector<8x128xi1>, vector<8x128xf32>
    %cst_328 = arith.constant dense<0.000000e+00> : vector<128xf32>
    %458 = vector.multi_reduction <add>, %457, %cst_328 [0] : vector<8x128xf32> to vector<128xf32>
    %459 = vector.shape_cast %458 : vector<128xf32> to vector<1x128xf32>
    %460 = arith.mulf %457, %27 : vector<8x128xf32>
    %cst_329 = arith.constant dense<0.000000e+00> : vector<128xf32>
    %461 = vector.multi_reduction <add>, %460, %cst_329 [0] : vector<8x128xf32> to vector<128xf32>
    %462 = vector.shape_cast %461 : vector<128xf32> to vector<1x128xf32>
    %c26 = arith.constant 26 : index
    %c0_330 = arith.constant 0 : index
    %463 = vector.load %arg4[%c26, %c0_330] : memref<32x128xf32, #tpu.memory_space<vmem>>, vector<1x128xf32>
    %464 = arith.addf %463, %459 : vector<1x128xf32>
    %c26_331 = arith.constant 26 : index
    %c0_332 = arith.constant 0 : index
    %465 = vector.load %arg4[%c26_331, %c0_332] : memref<32x128xf32, #tpu.memory_space<vmem>>, vector<1x128xf32>
    tpu.vector_store %arg4[%c26_331, %c0_332], %464 {strides = array<i32>} : memref<32x128xf32, #tpu.memory_space<vmem>>, vector<1x128xf32>,
    %c26_333 = arith.constant 26 : index
    %c0_334 = arith.constant 0 : index
    %466 = vector.load %arg5[%c26_333, %c0_334] : memref<32x128xf32, #tpu.memory_space<vmem>>, vector<1x128xf32>
    %467 = arith.addf %466, %462 : vector<1x128xf32>
    %c26_335 = arith.constant 26 : index
    %c0_336 = arith.constant 0 : index
    %468 = vector.load %arg5[%c26_335, %c0_336] : memref<32x128xf32, #tpu.memory_space<vmem>>, vector<1x128xf32>
    tpu.vector_store %arg5[%c26_335, %c0_336], %467 {strides = array<i32>} : memref<32x128xf32, #tpu.memory_space<vmem>>, vector<1x128xf32>,
    %cst_337 = arith.constant 2.700000e+01 : f32
    %469 = vector.broadcast %cst_337 : f32 to vector<8x128xf32>
    %470 = arith.cmpf oeq, %36, %469 : vector<8x128xf32>
    %cst_338 = arith.constant 1.000000e+00 : f32
    %cst_339 = arith.constant 0.000000e+00 : f32
    %471 = vector.broadcast %cst_338 : f32 to vector<8x128xf32>
    %472 = vector.broadcast %cst_339 : f32 to vector<8x128xf32>
    %473 = arith.select %470, %471, %472 : vector<8x128xi1>, vector<8x128xf32>
    %cst_340 = arith.constant dense<0.000000e+00> : vector<128xf32>
    %474 = vector.multi_reduction <add>, %473, %cst_340 [0] : vector<8x128xf32> to vector<128xf32>
    %475 = vector.shape_cast %474 : vector<128xf32> to vector<1x128xf32>
    %476 = arith.mulf %473, %27 : vector<8x128xf32>
    %cst_341 = arith.constant dense<0.000000e+00> : vector<128xf32>
    %477 = vector.multi_reduction <add>, %476, %cst_341 [0] : vector<8x128xf32> to vector<128xf32>
    %478 = vector.shape_cast %477 : vector<128xf32> to vector<1x128xf32>
    %c27 = arith.constant 27 : index
    %c0_342 = arith.constant 0 : index
    %479 = vector.load %arg4[%c27, %c0_342] : memref<32x128xf32, #tpu.memory_space<vmem>>, vector<1x128xf32>
    %480 = arith.addf %479, %475 : vector<1x128xf32>
    %c27_343 = arith.constant 27 : index
    %c0_344 = arith.constant 0 : index
    %481 = vector.load %arg4[%c27_343, %c0_344] : memref<32x128xf32, #tpu.memory_space<vmem>>, vector<1x128xf32>
    tpu.vector_store %arg4[%c27_343, %c0_344], %480 {strides = array<i32>} : memref<32x128xf32, #tpu.memory_space<vmem>>, vector<1x128xf32>,
    %c27_345 = arith.constant 27 : index
    %c0_346 = arith.constant 0 : index
    %482 = vector.load %arg5[%c27_345, %c0_346] : memref<32x128xf32, #tpu.memory_space<vmem>>, vector<1x128xf32>
    %483 = arith.addf %482, %478 : vector<1x128xf32>
    %c27_347 = arith.constant 27 : index
    %c0_348 = arith.constant 0 : index
    %484 = vector.load %arg5[%c27_347, %c0_348] : memref<32x128xf32, #tpu.memory_space<vmem>>, vector<1x128xf32>
    tpu.vector_store %arg5[%c27_347, %c0_348], %483 {strides = array<i32>} : memref<32x128xf32, #tpu.memory_space<vmem>>, vector<1x128xf32>,
    %cst_349 = arith.constant 2.800000e+01 : f32
    %485 = vector.broadcast %cst_349 : f32 to vector<8x128xf32>
    %486 = arith.cmpf oeq, %36, %485 : vector<8x128xf32>
    %cst_350 = arith.constant 1.000000e+00 : f32
    %cst_351 = arith.constant 0.000000e+00 : f32
    %487 = vector.broadcast %cst_350 : f32 to vector<8x128xf32>
    %488 = vector.broadcast %cst_351 : f32 to vector<8x128xf32>
    %489 = arith.select %486, %487, %488 : vector<8x128xi1>, vector<8x128xf32>
    %cst_352 = arith.constant dense<0.000000e+00> : vector<128xf32>
    %490 = vector.multi_reduction <add>, %489, %cst_352 [0] : vector<8x128xf32> to vector<128xf32>
    %491 = vector.shape_cast %490 : vector<128xf32> to vector<1x128xf32>
    %492 = arith.mulf %489, %27 : vector<8x128xf32>
    %cst_353 = arith.constant dense<0.000000e+00> : vector<128xf32>
    %493 = vector.multi_reduction <add>, %492, %cst_353 [0] : vector<8x128xf32> to vector<128xf32>
    %494 = vector.shape_cast %493 : vector<128xf32> to vector<1x128xf32>
    %c28 = arith.constant 28 : index
    %c0_354 = arith.constant 0 : index
    %495 = vector.load %arg4[%c28, %c0_354] : memref<32x128xf32, #tpu.memory_space<vmem>>, vector<1x128xf32>
    %496 = arith.addf %495, %491 : vector<1x128xf32>
    %c28_355 = arith.constant 28 : index
    %c0_356 = arith.constant 0 : index
    %497 = vector.load %arg4[%c28_355, %c0_356] : memref<32x128xf32, #tpu.memory_space<vmem>>, vector<1x128xf32>
    tpu.vector_store %arg4[%c28_355, %c0_356], %496 {strides = array<i32>} : memref<32x128xf32, #tpu.memory_space<vmem>>, vector<1x128xf32>,
    %c28_357 = arith.constant 28 : index
    %c0_358 = arith.constant 0 : index
    %498 = vector.load %arg5[%c28_357, %c0_358] : memref<32x128xf32, #tpu.memory_space<vmem>>, vector<1x128xf32>
    %499 = arith.addf %498, %494 : vector<1x128xf32>
    %c28_359 = arith.constant 28 : index
    %c0_360 = arith.constant 0 : index
    %500 = vector.load %arg5[%c28_359, %c0_360] : memref<32x128xf32, #tpu.memory_space<vmem>>, vector<1x128xf32>
    tpu.vector_store %arg5[%c28_359, %c0_360], %499 {strides = array<i32>} : memref<32x128xf32, #tpu.memory_space<vmem>>, vector<1x128xf32>,
    %cst_361 = arith.constant 2.900000e+01 : f32
    %501 = vector.broadcast %cst_361 : f32 to vector<8x128xf32>
    %502 = arith.cmpf oeq, %36, %501 : vector<8x128xf32>
    %cst_362 = arith.constant 1.000000e+00 : f32
    %cst_363 = arith.constant 0.000000e+00 : f32
    %503 = vector.broadcast %cst_362 : f32 to vector<8x128xf32>
    %504 = vector.broadcast %cst_363 : f32 to vector<8x128xf32>
    %505 = arith.select %502, %503, %504 : vector<8x128xi1>, vector<8x128xf32>
    %cst_364 = arith.constant dense<0.000000e+00> : vector<128xf32>
    %506 = vector.multi_reduction <add>, %505, %cst_364 [0] : vector<8x128xf32> to vector<128xf32>
    %507 = vector.shape_cast %506 : vector<128xf32> to vector<1x128xf32>
    %508 = arith.mulf %505, %27 : vector<8x128xf32>
    %cst_365 = arith.constant dense<0.000000e+00> : vector<128xf32>
    %509 = vector.multi_reduction <add>, %508, %cst_365 [0] : vector<8x128xf32> to vector<128xf32>
    %510 = vector.shape_cast %509 : vector<128xf32> to vector<1x128xf32>
    %c29 = arith.constant 29 : index
    %c0_366 = arith.constant 0 : index
    %511 = vector.load %arg4[%c29, %c0_366] : memref<32x128xf32, #tpu.memory_space<vmem>>, vector<1x128xf32>
    %512 = arith.addf %511, %507 : vector<1x128xf32>
    %c29_367 = arith.constant 29 : index
    %c0_368 = arith.constant 0 : index
    %513 = vector.load %arg4[%c29_367, %c0_368] : memref<32x128xf32, #tpu.memory_space<vmem>>, vector<1x128xf32>
    tpu.vector_store %arg4[%c29_367, %c0_368], %512 {strides = array<i32>} : memref<32x128xf32, #tpu.memory_space<vmem>>, vector<1x128xf32>,
    %c29_369 = arith.constant 29 : index
    %c0_370 = arith.constant 0 : index
    %514 = vector.load %arg5[%c29_369, %c0_370] : memref<32x128xf32, #tpu.memory_space<vmem>>, vector<1x128xf32>
    %515 = arith.addf %514, %510 : vector<1x128xf32>
    %c29_371 = arith.constant 29 : index
    %c0_372 = arith.constant 0 : index
    %516 = vector.load %arg5[%c29_371, %c0_372] : memref<32x128xf32, #tpu.memory_space<vmem>>, vector<1x128xf32>
    tpu.vector_store %arg5[%c29_371, %c0_372], %515 {strides = array<i32>} : memref<32x128xf32, #tpu.memory_space<vmem>>, vector<1x128xf32>,
    return
  }
  func.func @transform_0(%arg0: i32, %arg1: i32) -> (i32, i32) {
    %c1_i32 = arith.constant 1 : i32
    %0 = arith.muli %arg0, %c1_i32 : i32
    %1 = arith.addi %0, %arg1 : i32
    %c0_i32 = arith.constant 0 : i32
    %c0_i32_0 = arith.constant 0 : i32
    return %1, %c0_i32 : i32, i32
  }
  func.func @transform_1(%arg0: i32, %arg1: i32) -> (i32, i32) {
    %c1_i32 = arith.constant 1 : i32
    %0 = arith.muli %arg0, %c1_i32 : i32
    %1 = arith.addi %0, %arg1 : i32
    %c0_i32 = arith.constant 0 : i32
    %c0_i32_0 = arith.constant 0 : i32
    return %1, %c0_i32 : i32, i32
  }
  func.func @transform_2(%arg0: i32, %arg1: i32) -> (i32, i32) {
    %c0_i32 = arith.constant 0 : i32
    %c0_i32_0 = arith.constant 0 : i32
    return %arg0, %c0_i32 : i32, i32
  }
  func.func @transform_3(%arg0: i32, %arg1: i32) -> (i32, i32) {
    %c0_i32 = arith.constant 0 : i32
    %c0_i32_0 = arith.constant 0 : i32
    return %arg0, %c0_i32 : i32, i32
  }
}

</mosaic_0001>

<llo_original>
// kernel: ghmc_loss.1
$region0: #{ghmc_loss.1}
  #allocation0 [shape = 'u32[]', space=smem, size = 0x4, offset = 0x4, fixed_abs, tag = 'smem constant byte address 0x4 - core index']
  #allocation1 [shape = 'u32[72,128]{1,0:T(1,128)}', space=vmem, size = 0x9000, scoped, tag = 'internal scratch']
  %s0 = inlined_call_operand.vmem [shape: f32[16,128], index: 0, kind: input, shape index: {}]
  %s1 = inlined_call_operand.vmem [shape: f32[16,128], index: 1, kind: input, shape index: {}]
  %s2 = inlined_call_operand.vmem [shape: f32[64,128], index: 2, kind: output, shape index: {0}]
  %s3 = inlined_call_operand.vmem [shape: f32[64,128], index: 3, kind: output, shape index: {1}]
  %4 = xla_tuple %s2, %s3
  %s5 = sld [smem:[#allocation0]]
  $region53: #{ghmc_loss.1} parent=0
    _
  %s7 = ssub.s32 1, %s5
  %s8 = scalar_select 0, %s7, %s5
  loop: start=0, step=1, limit=4
  $region2: #{ghmc_loss.1} parent=0 // loop_pre_header
    _
  $region3: #{ghmc_loss.1} parent=0 // loop_header
    %s10 = sphi 0, %s14
    %p11 = scmp.ge.s32.totalorder %s10, 4
    %s17 = sphi 0, %s29
    %s18 = sphi 0, %s25
    %s19 = sphi 0, %s17
    %s20 = sphi 0, %s18
    %s21 = sphi 0, %s19
    %s22 = sphi 0, %s20
    %s34 = sphi 0, %s36
    %s37 = sphi 0, %s34
    %s38 = sphi 0, %s37
    %s54 = sphi 0, %s38
    %s62 = sphi 0, %s64
    %s65 = sphi 0, %s62
    %s66 = sphi 0, %s65
    %s82 = sphi 0, %s66
    %s88 = sphi 0, %s90
    %s91 = sphi 0, %s88
    %s92 = sphi 0, %s91
    %s108 = sphi 0, %s92
    %s114 = sphi 0, %s116
    %s117 = sphi 0, %s114
    %s118 = sphi 0, %s117
    %s134 = sphi 0, %s118
  $region4: #{ghmc_loss.1} parent=0 // loop_header_branch
    %13 = sbr.rel (%p11) target = $region8
  $region5: #{ghmc_loss.1} parent=0 // loop_body
    %s15 = ssub.s32 %s10, 1
    %s16 = ssub.s32 %s10, 2
    %s23 = sadd.s32 1, %s18
    %p24 = scmp.ge.s32.totalorder %s23, 1
    %s25 = scalar_select %p24, 0, %s23
    %s26 = sadd.s32 1, %s17
    %s27 = scalar_select %p24, %s26, %s17
    %p28 = scmp.ge.s32.totalorder %s27, 2
    %s29 = scalar_select %p28, 0, %s27
    %s30 = sadd.s32 %s17, %s18
    %s31 = sadd.s32 %s29, %s25
    %s32 = ssub.s32 %s30, %s31
    %p33 = scmp.eq.s32.totalorder %s32, 0
    %s35 = sadd.s32 %s34, 1
    %s36 = scalar_select %p33, %s34, %s35
    %p39 = pneg %p33
    %p40 = scmp.eq.s32.totalorder %s10, 1
    %p41 = por %p39, %p40
    %p42 = scmp.ne.s32.totalorder %s34, %s37
    %p43 = scmp.eq.s32.totalorder %s10, 0
    %p44 = por %p42, %p43
    %p45 = scmp.ne.s32.totalorder %s34, %s37
    %p46 = scmp.eq.s32.totalorder %s15, 1
    %p47 = por %p45, %p46
    %p48 = scmp.ne.s32.totalorder %s37, %s38
    %p49 = scmp.eq.s32.totalorder %s15, 0
    %p50 = por %p48, %p49
    %p51 = scmp.ne.s32.totalorder %s37, %s38
    %p52 = scmp.eq.s32.totalorder %s16, 1
    %p53 = por %p51, %p52
    %p55 = scmp.ne.s32.totalorder %s38, %s54
    %p56 = scmp.eq.s32.totalorder %s16, 0
    %p57 = por %p55, %p56
    %s58 = sadd.s32 %s17, %s18
    %s59 = sadd.s32 %s29, %s25
    %s60 = ssub.s32 %s58, %s59
    %p61 = scmp.eq.s32.totalorder %s60, 0
    %s63 = sadd.s32 %s62, 1
    %s64 = scalar_select %p61, %s62, %s63
    %p67 = pneg %p61
    %p68 = scmp.eq.s32.totalorder %s10, 1
    %p69 = por %p67, %p68
    %p70 = scmp.ne.s32.totalorder %s62, %s65
    %p71 = scmp.eq.s32.totalorder %s10, 0
    %p72 = por %p70, %p71
    %p73 = scmp.ne.s32.totalorder %s62, %s65
    %p74 = scmp.eq.s32.totalorder %s15, 1
    %p75 = por %p73, %p74
    %p76 = scmp.ne.s32.totalorder %s65, %s66
    %p77 = scmp.eq.s32.totalorder %s15, 0
    %p78 = por %p76, %p77
    %p79 = scmp.ne.s32.totalorder %s65, %s66
    %p80 = scmp.eq.s32.totalorder %s16, 1
    %p81 = por %p79, %p80
    %p83 = scmp.ne.s32.totalorder %s66, %s82
    %p84 = scmp.eq.s32.totalorder %s16, 0
    %p85 = por %p83, %p84
    %s86 = ssub.s32 %s17, %s29
    %p87 = scmp.eq.s32.totalorder %s86, 0
    %s89 = sadd.s32 %s88, 1
    %s90 = scalar_select %p87, %s88, %s89
    %p93 = pneg %p87
    %p94 = scmp.eq.s32.totalorder %s10, 1
    %p95 = por %p93, %p94
    %p96 = scmp.ne.s32.totalorder %s88, %s91
    %p97 = scmp.eq.s32.totalorder %s10, 0
    %p98 = por %p96, %p97
    %p99 = scmp.ne.s32.totalorder %s88, %s91
    %p100 = scmp.eq.s32.totalorder %s15, 1
    %p101 = por %p99, %p100
    %p102 = scmp.ne.s32.totalorder %s91, %s92
    %p103 = scmp.eq.s32.totalorder %s15, 0
    %p104 = por %p102, %p103
    %p105 = scmp.ne.s32.totalorder %s91, %s92
    %p106 = scmp.eq.s32.totalorder %s16, 1
    %p107 = por %p105, %p106
    %p109 = scmp.ne.s32.totalorder %s92, %s108
    %p110 = scmp.eq.s32.totalorder %s16, 0
    %p111 = por %p109, %p110
    %s112 = ssub.s32 %s17, %s29
    %p113 = scmp.eq.s32.totalorder %s112, 0
    %s115 = sadd.s32 %s114, 1
    %s116 = scalar_select %p113, %s114, %s115
    %p119 = pneg %p113
    %p120 = scmp.eq.s32.totalorder %s10, 1
    %p121 = por %p119, %p120
    %p122 = scmp.ne.s32.totalorder %s114, %s117
    %p123 = scmp.eq.s32.totalorder %s10, 0
    %p124 = por %p122, %p123
    %p125 = scmp.ne.s32.totalorder %s114, %s117
    %p126 = scmp.eq.s32.totalorder %s15, 1
    %p127 = por %p125, %p126
    %p128 = scmp.ne.s32.totalorder %s117, %s118
    %p129 = scmp.eq.s32.totalorder %s15, 0
    %p130 = por %p128, %p129
    %p131 = scmp.ne.s32.totalorder %s117, %s118
    %p132 = scmp.eq.s32.totalorder %s16, 1
    %p133 = por %p131, %p132
    %p135 = scmp.ne.s32.totalorder %s118, %s134
    %p136 = scmp.eq.s32.totalorder %s16, 0
    %p137 = por %p135, %p136
    %p138 = scmp.le.s32.totalorder 1, %s10
    %p139 = scmp.lt.s32.totalorder %s10, 3
    %p140 = pnand %p138, %p139
    %p141 = pneg %p140
    // Predicated region
    $region9: #{ghmc_loss.1} parent=5 // pred_check
      _
    $region10: #{ghmc_loss.1} parent=5 // pred_check_branch
      %143 = sbr.rel (%p140) target = $region12
    $region11: #{ghmc_loss.1} parent=5 // pred_region
      %s144 = ssub.s32 %s10, 1
    $region12: #{ghmc_loss.1} parent=5 // pred_fallthru
      _
    %p145 = scmp.lt.s32.totalorder %s10, 2
    // Predicated region
    $region13: #{ghmc_loss.1} parent=5 // pred_check
      %p146 = pneg %p145
    $region14: #{ghmc_loss.1} parent=5 // pred_check_branch
      %148 = sbr.rel (%p146) target = $region16
    $region15: #{ghmc_loss.1} parent=5 // pred_region
      // Predicated region
      $region17: #{ghmc_loss.1} parent=15 // pred_check
        %p149 = pneg %p44
      $region18: #{ghmc_loss.1} parent=15 // pred_check_branch
        %151 = sbr.rel (%p149) target = $region20
      $region19: #{ghmc_loss.1} parent=15 // pred_region
        %s152 = sadd.s32 %s17, %s18
        %p153 = scmp.lt.s32.totalorder %s152, 1
        %s154 = scalar_select %p153, %s152, 1
        %s155 = smul.addr %s154, 8
        %s156 = scalar_lea.vmem %s0, %s155
        %s157 = sadd.s32 %s17, %s18
      $region20: #{ghmc_loss.1} parent=15 // pred_fallthru
        _
      // Predicated region
      $region21: #{ghmc_loss.1} parent=15 // pred_check
        %p158 = pneg %p72
      $region22: #{ghmc_loss.1} parent=15 // pred_check_branch
        %160 = sbr.rel (%p158) target = $region24
      $region23: #{ghmc_loss.1} parent=15 // pred_region
        %s161 = sadd.s32 %s17, %s18
        %p162 = scmp.lt.s32.totalorder %s161, 1
        %s163 = scalar_select %p162, %s161, 1
        %s164 = smul.addr %s163, 8
        %s165 = scalar_lea.vmem %s1, %s164
        %s166 = sadd.s32 %s17, %s18
      $region24: #{ghmc_loss.1} parent=15 // pred_fallthru
        _
    $region16: #{ghmc_loss.1} parent=5 // pred_fallthru
      _
    %p167 = scmp.le.s32.totalorder 1, %s10
    %p168 = scmp.lt.s32.totalorder %s10, 3
    %p169 = pnand %p167, %p168
    %p170 = pneg %p169
    // Predicated region
    $region25: #{ghmc_loss.1} parent=5 // pred_check
      _
    $region26: #{ghmc_loss.1} parent=5 // pred_check_branch
      %172 = sbr.rel (%p169) target = $region28
    $region27: #{ghmc_loss.1} parent=5 // pred_region
      %s173 = ssub.s32 %s10, 1
      %s174 = sadd.s32 %s19, %s20
      %p175 = scmp.lt.s32.totalorder %s174, 1
      %s176 = scalar_select %p175, %s174, 1
      %s177 = smul.addr %s176, 8
      %s178 = scalar_lea.vmem %s0, %s177
      %p179 = pneg %p50
      %p180 = pneg %p47
      %s181 = sadd.s32 %s19, %s20
      %p182 = scmp.lt.s32.totalorder %s181, 1
      %s183 = scalar_select %p182, %s181, 1
      %s184 = smul.addr %s183, 8
      %s185 = scalar_lea.vmem %s1, %s184
      %p186 = pneg %p78
      %p187 = pneg %p75
      %p188 = pneg %p104
      %p189 = pneg %p101
      %s190 = smul.u32 4, %s19
      %p191 = scmp.lt.s32.totalorder %s190, 7
      %s192 = scalar_select %p191, %s190, 7
      %s193 = smul.addr %s192, 8
      %s194 = scalar_lea.vmem %s2, %s193
      %p195 = pneg %p130
      %p196 = pneg %p127
      %s197 = smul.u32 4, %s19
      %p198 = scmp.lt.s32.totalorder %s197, 7
      %s199 = scalar_select %p198, %s197, 7
      %s200 = smul.addr %s199, 8
      %s201 = scalar_lea.vmem %s3, %s200
      %s202 = sadd.s32 %s19, %s20
      %p203 = scmp.lt.s32.totalorder %s202, 1
      %s204 = scalar_select %p203, %s202, 1
      %s205 = smul.addr %s204, 8
      %s206 = scalar_lea.vmem %s0, %s205
      %s207 = sadd.s32 %s19, %s20
      %s208 = sadd.s32 %s19, %s20
      %p209 = scmp.lt.s32.totalorder %s208, 1
      %s210 = scalar_select %p209, %s208, 1
      %s211 = smul.addr %s210, 8
      %s212 = scalar_lea.vmem %s1, %s211
      %s213 = sadd.s32 %s19, %s20
      %s214 = smul.u32 4, %s19
      %p215 = scmp.lt.s32.totalorder %s214, 7
      %s216 = scalar_select %p215, %s214, 7
      %s217 = smul.addr %s216, 8
      %s218 = scalar_lea.vmem %s2, %s217
      %s219 = smul.u32 4, %s19
      %s220 = smul.u32 4, %s19
      %p221 = scmp.lt.s32.totalorder %s220, 7
      %s222 = scalar_select %p221, %s220, 7
      %s223 = smul.addr %s222, 8
      %s224 = scalar_lea.vmem %s3, %s223
      %s225 = smul.u32 4, %s19
      %p226 = scmp.eq.s32.totalorder %s20, 0
      // Predicated region
      $region29: #{ghmc_loss.1} parent=27 // pred_check
        %p227 = pneg %p226
      $region30: #{ghmc_loss.1} parent=27 // pred_check_branch
        %229 = sbr.rel (%p227) target = $region32
      $region31: #{ghmc_loss.1} parent=27 // pred_region
        %230 = vst [vmem:[%s218] sm:$0xff] 0.0
        %231 = vst [vmem:[%s218 + $0x8] sm:$0xff] 0.0
        %232 = vst [vmem:[%s218 + $0x10] sm:$0xff] 0.0
        %233 = vst [vmem:[%s218 + $0x18] sm:$0xff] 0.0
        %234 = vst [vmem:[%s224] sm:$0xff] 0.0
        %235 = vst [vmem:[%s224 + $0x8] sm:$0xff] 0.0
        %236 = vst [vmem:[%s224 + $0x10] sm:$0xff] 0.0
        %237 = vst [vmem:[%s224 + $0x18] sm:$0xff] 0.0
      $region32: #{ghmc_loss.1} parent=27 // pred_fallthru
        _
      %v238 = vld [vmem:[%s206] sm:$0xff]
      %v239 = vld [vmem:[%s212] sm:$0xff]
      %v240 = vand.u32 2147483647, %v238
      %v241 = vsub.f32 0.0, %v240
      %v242 = vmul.f32 %v241, 1.442695
      %v243 = vpow.pop %v242
      %v244 = vadd.f32 %v243, 1.0
      %v245 = vrcp.pop %v244
      %v246 = vmul.f32 %v244, %v245
      %v247 = vsub.f32 2.0, %v246
      %v248 = vmul.f32 %v245, %v247
      %vm249 = vcmp.ge.f32.partialorder %v238, 0.0
      %v250 = vmul.f32 %v243, %v248
      %v251 = vsel %vm249, %v248, %v250
      %v252 = vsub.f32 %v251, %v239
      %v253 = vand.u32 2147483647, %v252
      %v254 = vmax.f32 %v238, 0.0
      %v255 = vmul.f32 %v238, %v239
      %v256 = vsub.f32 %v254, %v255
      %v257 = vadd.f32 %v243, 1.0
      %v258 = vlog2.pop %v257
      %v259 = vmul.f32 %v258, 0.6931472
      %v260 = vmul.f32 -0.5, %v243
      %v261 = vadd.f32 %v260, 1.0
      %v262 = vmul.f32 %v261, %v243
      %v263 = vand.u32 2147483647, %v243
      %vm264 = vcmp.lt.f32.partialorder %v263, 0.0004427343
      %v265 = vsel %vm264, %v262, %v259
      %v266 = vadd.f32 %v256, %v265
      %v267 = vmul.f32 %v253, 30.0
      %v268 = vfloor.f32 %v267
      %vm269 = vcmp.lt.f32.partialorder %v253, 1.000001
      %v270 = vmin.f32 %v268, 29.0
      %v271 = vsel %vm269, %v270, -1.0
      %vm272 = vcmp.eq.f32.partialorder %v271, 0.0
      %v273 = vsel %vm272, 1.0, 0.0
      %v274 = vrot.slane %v273, 4
      %v275 = vadd.f32 %v273, %v274
      %v276 = vrot.slane %v275, 2
      %v277 = vadd.f32 %v275, %v276
      %v278 = vrot.slane %v277, 1
      %v279 = vadd.f32 %v277, %v278
      %v280 = vmul.f32 %v273, %v266
      %v281 = vrot.slane %v280, 4
      %v282 = vadd.f32 %v280, %v281
      %v283 = vrot.slane %v282, 2
      %v284 = vadd.f32 %v282, %v283
      %v285 = vrot.slane %v284, 1
      %v286 = vadd.f32 %v284, %v285
      %v287 = vld [vmem:[%s218] sm:$0x1]
      %v288 = vadd.f32 %v287, %v279
      %289 = vst [vmem:[%s218] sm:$0x1] %v288
      %v290 = vld [vmem:[%s224] sm:$0x1]
      %v291 = vadd.f32 %v290, %v286
      %292 = vst [vmem:[%s224] sm:$0x1] %v291
      %vm293 = vcmp.eq.f32.partialorder %v271, 1.0
      %v294 = vsel %vm293, 1.0, 0.0
      %v295 = vrot.slane %v294, 4
      %v296 = vadd.f32 %v294, %v295
      %v297 = vrot.slane %v296, 2
      %v298 = vadd.f32 %v296, %v297
      %v299 = vrot.slane %v298, 1
      %v300 = vadd.f32 %v298, %v299
      %v301 = vmul.f32 %v294, %v266
      %v302 = vrot.slane %v301, 4
      %v303 = vadd.f32 %v301, %v302
      %v304 = vrot.slane %v303, 2
      %v305 = vadd.f32 %v303, %v304
      %v306 = vrot.slane %v305, 1
      %v307 = vadd.f32 %v305, %v306
      %v308 = vld [vmem:[%s218 + $0x1] sm:$0x1]
      %v309 = vadd.f32 %v308, %v300
      %310 = vst [vmem:[%s218 + $0x1] sm:$0x1] %v309
      %v311 = vld [vmem:[%s224 + $0x1] sm:$0x1]
      %v312 = vadd.f32 %v311, %v307
      %313 = vst [vmem:[%s224 + $0x1] sm:$0x1] %v312
      %vm314 = vcmp.eq.f32.partialorder %v271, 2.0
      %v315 = vsel %vm314, 1.0, 0.0
      %v316 = vrot.slane %v315, 4
      %v317 = vadd.f32 %v315, %v316
      %v318 = vrot.slane %v317, 2
      %v319 = vadd.f32 %v317, %v318
      %v320 = vrot.slane %v319, 1
      %v321 = vadd.f32 %v319, %v320
      %v322 = vmul.f32 %v315, %v266
      %v323 = vrot.slane %v322, 4
      %v324 = vadd.f32 %v322, %v323
      %v325 = vrot.slane %v324, 2
      %v326 = vadd.f32 %v324, %v325
      %v327 = vrot.slane %v326, 1
      %v328 = vadd.f32 %v326, %v327
      %v329 = vld [vmem:[%s218 + $0x2] sm:$0x1]
      %v330 = vadd.f32 %v329, %v321
      %331 = vst [vmem:[%s218 + $0x2] sm:$0x1] %v330
      %v332 = vld [vmem:[%s224 + $0x2] sm:$0x1]
      %v333 = vadd.f32 %v332, %v328
      %334 = vst [vmem:[%s224 + $0x2] sm:$0x1] %v333
      %vm335 = vcmp.eq.f32.partialorder %v271, 3.0
      %v336 = vsel %vm335, 1.0, 0.0
      %v337 = vrot.slane %v336, 4
      %v338 = vadd.f32 %v336, %v337
      %v339 = vrot.slane %v338, 2
      %v340 = vadd.f32 %v338, %v339
      %v341 = vrot.slane %v340, 1
      %v342 = vadd.f32 %v340, %v341
      %v343 = vmul.f32 %v336, %v266
      %v344 = vrot.slane %v343, 4
      %v345 = vadd.f32 %v343, %v344
      %v346 = vrot.slane %v345, 2
      %v347 = vadd.f32 %v345, %v346
      %v348 = vrot.slane %v347, 1
      %v349 = vadd.f32 %v347, %v348
      %v350 = vld [vmem:[%s218 + $0x3] sm:$0x1]
      %v351 = vadd.f32 %v350, %v342
      %352 = vst [vmem:[%s218 + $0x3] sm:$0x1] %v351
      %v353 = vld [vmem:[%s224 + $0x3] sm:$0x1]
      %v354 = vadd.f32 %v353, %v349
      %355 = vst [vmem:[%s224 + $0x3] sm:$0x1] %v354
      %vm356 = vcmp.eq.f32.partialorder %v271, 4.0
      %v357 = vsel %vm356, 1.0, 0.0
      %v358 = vrot.slane %v357, 4
      %v359 = vadd.f32 %v357, %v358
      %v360 = vrot.slane %v359, 2
      %v361 = vadd.f32 %v359, %v360
      %v362 = vrot.slane %v361, 1
      %v363 = vadd.f32 %v361, %v362
      %v364 = vmul.f32 %v357, %v266
      %v365 = vrot.slane %v364, 4
      %v366 = vadd.f32 %v364, %v365
      %v367 = vrot.slane %v366, 2
      %v368 = vadd.f32 %v366, %v367
      %v369 = vrot.slane %v368, 1
      %v370 = vadd.f32 %v368, %v369
      %v371 = vld [vmem:[%s218 + $0x4] sm:$0x1]
      %v372 = vadd.f32 %v371, %v363
      %373 = vst [vmem:[%s218 + $0x4] sm:$0x1] %v372
      %v374 = vld [vmem:[%s224 + $0x4] sm:$0x1]
      %v375 = vadd.f32 %v374, %v370
      %376 = vst [vmem:[%s224 + $0x4] sm:$0x1] %v375
      %vm377 = vcmp.eq.f32.partialorder %v271, 5.0
      %v378 = vsel %vm377, 1.0, 0.0
      %v379 = vrot.slane %v378, 4
      %v380 = vadd.f32 %v378, %v379
      %v381 = vrot.slane %v380, 2
      %v382 = vadd.f32 %v380, %v381
      %v383 = vrot.slane %v382, 1
      %v384 = vadd.f32 %v382, %v383
      %v385 = vmul.f32 %v378, %v266
      %v386 = vrot.slane %v385, 4
      %v387 = vadd.f32 %v385, %v386
      %v388 = vrot.slane %v387, 2
      %v389 = vadd.f32 %v387, %v388
      %v390 = vrot.slane %v389, 1
      %v391 = vadd.f32 %v389, %v390
      %v392 = vld [vmem:[%s218 + $0x5] sm:$0x1]
      %v393 = vadd.f32 %v392, %v384
      %394 = vst [vmem:[%s218 + $0x5] sm:$0x1] %v393
      %v395 = vld [vmem:[%s224 + $0x5] sm:$0x1]
      %v396 = vadd.f32 %v395, %v391
      %397 = vst [vmem:[%s224 + $0x5] sm:$0x1] %v396
      %vm398 = vcmp.eq.f32.partialorder %v271, 6.0
      %v399 = vsel %vm398, 1.0, 0.0
      %v400 = vrot.slane %v399, 4
      %v401 = vadd.f32 %v399, %v400
      %v402 = vrot.slane %v401, 2
      %v403 = vadd.f32 %v401, %v402
      %v404 = vrot.slane %v403, 1
      %v405 = vadd.f32 %v403, %v404
      %v406 = vmul.f32 %v399, %v266
      %v407 = vrot.slane %v406, 4
      %v408 = vadd.f32 %v406, %v407
      %v409 = vrot.slane %v408, 2
      %v410 = vadd.f32 %v408, %v409
      %v411 = vrot.slane %v410, 1
      %v412 = vadd.f32 %v410, %v411
      %v413 = vld [vmem:[%s218 + $0x6] sm:$0x1]
      %v414 = vadd.f32 %v413, %v405
      %415 = vst [vmem:[%s218 + $0x6] sm:$0x1] %v414
      %v416 = vld [vmem:[%s224 + $0x6] sm:$0x1]
      %v417 = vadd.f32 %v416, %v412
      %418 = vst [vmem:[%s224 + $0x6] sm:$0x1] %v417
      %vm419 = vcmp.eq.f32.partialorder %v271, 7.0
      %v420 = vsel %vm419, 1.0, 0.0
      %v421 = vrot.slane %v420, 4
      %v422 = vadd.f32 %v420, %v421
      %v423 = vrot.slane %v422, 2
      %v424 = vadd.f32 %v422, %v423
      %v425 = vrot.slane %v424, 1
      %v426 = vadd.f32 %v424, %v425
      %v427 = vmul.f32 %v420, %v266
      %v428 = vrot.slane %v427, 4
      %v429 = vadd.f32 %v427, %v428
      %v430 = vrot.slane %v429, 2
      %v431 = vadd.f32 %v429, %v430
      %v432 = vrot.slane %v431, 1
      %v433 = vadd.f32 %v431, %v432
      %v434 = vld [vmem:[%s218 + $0x7] sm:$0x1]
      %v435 = vadd.f32 %v434, %v426
      %436 = vst [vmem:[%s218 + $0x7] sm:$0x1] %v435
      %v437 = vld [vmem:[%s224 + $0x7] sm:$0x1]
      %v438 = vadd.f32 %v437, %v433
      %439 = vst [vmem:[%s224 + $0x7] sm:$0x1] %v438
      %vm440 = vcmp.eq.f32.partialorder %v271, 8.0
      %v441 = vsel %vm440, 1.0, 0.0
      %v442 = vrot.slane %v441, 4
      %v443 = vadd.f32 %v441, %v442
      %v444 = vrot.slane %v443, 2
      %v445 = vadd.f32 %v443, %v444
      %v446 = vrot.slane %v445, 1
      %v447 = vadd.f32 %v445, %v446
      %v448 = vmul.f32 %v441, %v266
      %v449 = vrot.slane %v448, 4
      %v450 = vadd.f32 %v448, %v449
      %v451 = vrot.slane %v450, 2
      %v452 = vadd.f32 %v450, %v451
      %v453 = vrot.slane %v452, 1
      %v454 = vadd.f32 %v452, %v453
      %v455 = vld [vmem:[%s218 + $0x8] sm:$0x1]
      %v456 = vadd.f32 %v455, %v447
      %457 = vst [vmem:[%s218 + $0x8] sm:$0x1] %v456
      %v458 = vld [vmem:[%s224 + $0x8] sm:$0x1]
      %v459 = vadd.f32 %v458, %v454
      %460 = vst [vmem:[%s224 + $0x8] sm:$0x1] %v459
      %vm461 = vcmp.eq.f32.partialorder %v271, 9.0
      %v462 = vsel %vm461, 1.0, 0.0
      %v463 = vrot.slane %v462, 4
      %v464 = vadd.f32 %v462, %v463
      %v465 = vrot.slane %v464, 2
      %v466 = vadd.f32 %v464, %v465
      %v467 = vrot.slane %v466, 1
      %v468 = vadd.f32 %v466, %v467
      %v469 = vmul.f32 %v462, %v266
      %v470 = vrot.slane %v469, 4
      %v471 = vadd.f32 %v469, %v470
      %v472 = vrot.slane %v471, 2
      %v473 = vadd.f32 %v471, %v472
      %v474 = vrot.slane %v473, 1
      %v475 = vadd.f32 %v473, %v474
      %v476 = vld [vmem:[%s218 + $0x9] sm:$0x1]
      %v477 = vadd.f32 %v476, %v468
      %478 = vst [vmem:[%s218 + $0x9] sm:$0x1] %v477
      %v479 = vld [vmem:[%s224 + $0x9] sm:$0x1]
      %v480 = vadd.f32 %v479, %v475
      %481 = vst [vmem:[%s224 + $0x9] sm:$0x1] %v480
      %vm482 = vcmp.eq.f32.partialorder %v271, 10.0
      %v483 = vsel %vm482, 1.0, 0.0
      %v484 = vrot.slane %v483, 4
      %v485 = vadd.f32 %v483, %v484
      %v486 = vrot.slane %v485, 2
      %v487 = vadd.f32 %v485, %v486
      %v488 = vrot.slane %v487, 1
      %v489 = vadd.f32 %v487, %v488
      %v490 = vmul.f32 %v483, %v266
      %v491 = vrot.slane %v490, 4
      %v492 = vadd.f32 %v490, %v491
      %v493 = vrot.slane %v492, 2
      %v494 = vadd.f32 %v492, %v493
      %v495 = vrot.slane %v494, 1
      %v496 = vadd.f32 %v494, %v495
      %v497 = vld [vmem:[%s218 + $0xa] sm:$0x1]
      %v498 = vadd.f32 %v497, %v489
      %499 = vst [vmem:[%s218 + $0xa] sm:$0x1] %v498
      %v500 = vld [vmem:[%s224 + $0xa] sm:$0x1]
      %v501 = vadd.f32 %v500, %v496
      %502 = vst [vmem:[%s224 + $0xa] sm:$0x1] %v501
      %vm503 = vcmp.eq.f32.partialorder %v271, 11.0
      %v504 = vsel %vm503, 1.0, 0.0
      %v505 = vrot.slane %v504, 4
      %v506 = vadd.f32 %v504, %v505
      %v507 = vrot.slane %v506, 2
      %v508 = vadd.f32 %v506, %v507
      %v509 = vrot.slane %v508, 1
      %v510 = vadd.f32 %v508, %v509
      %v511 = vmul.f32 %v504, %v266
      %v512 = vrot.slane %v511, 4
      %v513 = vadd.f32 %v511, %v512
      %v514 = vrot.slane %v513, 2
      %v515 = vadd.f32 %v513, %v514
      %v516 = vrot.slane %v515, 1
      %v517 = vadd.f32 %v515, %v516
      %v518 = vld [vmem:[%s218 + $0xb] sm:$0x1]
      %v519 = vadd.f32 %v518, %v510
      %520 = vst [vmem:[%s218 + $0xb] sm:$0x1] %v519
      %v521 = vld [vmem:[%s224 + $0xb] sm:$0x1]
      %v522 = vadd.f32 %v521, %v517
      %523 = vst [vmem:[%s224 + $0xb] sm:$0x1] %v522
      %vm524 = vcmp.eq.f32.partialorder %v271, 12.0
      %v525 = vsel %vm524, 1.0, 0.0
      %v526 = vrot.slane %v525, 4
      %v527 = vadd.f32 %v525, %v526
      %v528 = vrot.slane %v527, 2
      %v529 = vadd.f32 %v527, %v528
      %v530 = vrot.slane %v529, 1
      %v531 = vadd.f32 %v529, %v530
      %v532 = vmul.f32 %v525, %v266
      %v533 = vrot.slane %v532, 4
      %v534 = vadd.f32 %v532, %v533
      %v535 = vrot.slane %v534, 2
      %v536 = vadd.f32 %v534, %v535
      %v537 = vrot.slane %v536, 1
      %v538 = vadd.f32 %v536, %v537
      %v539 = vld [vmem:[%s218 + $0xc] sm:$0x1]
      %v540 = vadd.f32 %v539, %v531
      %541 = vst [vmem:[%s218 + $0xc] sm:$0x1] %v540
      %v542 = vld [vmem:[%s224 + $0xc] sm:$0x1]
      %v543 = vadd.f32 %v542, %v538
      %544 = vst [vmem:[%s224 + $0xc] sm:$0x1] %v543
      %vm545 = vcmp.eq.f32.partialorder %v271, 13.0
      %v546 = vsel %vm545, 1.0, 0.0
      %v547 = vrot.slane %v546, 4
      %v548 = vadd.f32 %v546, %v547
      %v549 = vrot.slane %v548, 2
      %v550 = vadd.f32 %v548, %v549
      %v551 = vrot.slane %v550, 1
      %v552 = vadd.f32 %v550, %v551
      %v553 = vmul.f32 %v546, %v266
      %v554 = vrot.slane %v553, 4
      %v555 = vadd.f32 %v553, %v554
      %v556 = vrot.slane %v555, 2
      %v557 = vadd.f32 %v555, %v556
      %v558 = vrot.slane %v557, 1
      %v559 = vadd.f32 %v557, %v558
      %v560 = vld [vmem:[%s218 + $0xd] sm:$0x1]
      %v561 = vadd.f32 %v560, %v552
      %562 = vst [vmem:[%s218 + $0xd] sm:$0x1] %v561
      %v563 = vld [vmem:[%s224 + $0xd] sm:$0x1]
      %v564 = vadd.f32 %v563, %v559
      %565 = vst [vmem:[%s224 + $0xd] sm:$0x1] %v564
      %vm566 = vcmp.eq.f32.partialorder %v271, 14.0
      %v567 = vsel %vm566, 1.0, 0.0
      %v568 = vrot.slane %v567, 4
      %v569 = vadd.f32 %v567, %v568
      %v570 = vrot.slane %v569, 2
      %v571 = vadd.f32 %v569, %v570
      %v572 = vrot.slane %v571, 1
      %v573 = vadd.f32 %v571, %v572
      %v574 = vmul.f32 %v567, %v266
      %v575 = vrot.slane %v574, 4
      %v576 = vadd.f32 %v574, %v575
      %v577 = vrot.slane %v576, 2
      %v578 = vadd.f32 %v576, %v577
      %v579 = vrot.slane %v578, 1
      %v580 = vadd.f32 %v578, %v579
      %v581 = vld [vmem:[%s218 + $0xe] sm:$0x1]
      %v582 = vadd.f32 %v581, %v573
      %583 = vst [vmem:[%s218 + $0xe] sm:$0x1] %v582
      %v584 = vld [vmem:[%s224 + $0xe] sm:$0x1]
      %v585 = vadd.f32 %v584, %v580
      %586 = vst [vmem:[%s224 + $0xe] sm:$0x1] %v585
      %vm587 = vcmp.eq.f32.partialorder %v271, 15.0
      %v588 = vsel %vm587, 1.0, 0.0
      %v589 = vrot.slane %v588, 4
      %v590 = vadd.f32 %v588, %v589
      %v591 = vrot.slane %v590, 2
      %v592 = vadd.f32 %v590, %v591
      %v593 = vrot.slane %v592, 1
      %v594 = vadd.f32 %v592, %v593
      %v595 = vmul.f32 %v588, %v266
      %v596 = vrot.slane %v595, 4
      %v597 = vadd.f32 %v595, %v596
      %v598 = vrot.slane %v597, 2
      %v599 = vadd.f32 %v597, %v598
      %v600 = vrot.slane %v599, 1
      %v601 = vadd.f32 %v599, %v600
      %v602 = vld [vmem:[%s218 + $0xf] sm:$0x1]
      %v603 = vadd.f32 %v602, %v594
      %604 = vst [vmem:[%s218 + $0xf] sm:$0x1] %v603
      %v605 = vld [vmem:[%s224 + $0xf] sm:$0x1]
      %v606 = vadd.f32 %v605, %v601
      %607 = vst [vmem:[%s224 + $0xf] sm:$0x1] %v606
      %vm608 = vcmp.eq.f32.partialorder %v271, 16.0
      %v609 = vsel %vm608, 1.0, 0.0
      %v610 = vrot.slane %v609, 4
      %v611 = vadd.f32 %v609, %v610
      %v612 = vrot.slane %v611, 2
      %v613 = vadd.f32 %v611, %v612
      %v614 = vrot.slane %v613, 1
      %v615 = vadd.f32 %v613, %v614
      %v616 = vmul.f32 %v609, %v266
      %v617 = vrot.slane %v616, 4
      %v618 = vadd.f32 %v616, %v617
      %v619 = vrot.slane %v618, 2
      %v620 = vadd.f32 %v618, %v619
      %v621 = vrot.slane %v620, 1
      %v622 = vadd.f32 %v620, %v621
      %v623 = vld [vmem:[%s218 + $0x10] sm:$0x1]
      %v624 = vadd.f32 %v623, %v615
      %625 = vst [vmem:[%s218 + $0x10] sm:$0x1] %v624
      %v626 = vld [vmem:[%s224 + $0x10] sm:$0x1]
      %v627 = vadd.f32 %v626, %v622
      %628 = vst [vmem:[%s224 + $0x10] sm:$0x1] %v627
      %vm629 = vcmp.eq.f32.partialorder %v271, 17.0
      %v630 = vsel %vm629, 1.0, 0.0
      %v631 = vrot.slane %v630, 4
      %v632 = vadd.f32 %v630, %v631
      %v633 = vrot.slane %v632, 2
      %v634 = vadd.f32 %v632, %v633
      %v635 = vrot.slane %v634, 1
      %v636 = vadd.f32 %v634, %v635
      %v637 = vmul.f32 %v630, %v266
      %v638 = vrot.slane %v637, 4
      %v639 = vadd.f32 %v637, %v638
      %v640 = vrot.slane %v639, 2
      %v641 = vadd.f32 %v639, %v640
      %v642 = vrot.slane %v641, 1
      %v643 = vadd.f32 %v641, %v642
      %v644 = vld [vmem:[%s218 + $0x11] sm:$0x1]
      %v645 = vadd.f32 %v644, %v636
      %646 = vst [vmem:[%s218 + $0x11] sm:$0x1] %v645
      %v647 = vld [vmem:[%s224 + $0x11] sm:$0x1]
      %v648 = vadd.f32 %v647, %v643
      %649 = vst [vmem:[%s224 + $0x11] sm:$0x1] %v648
      %vm650 = vcmp.eq.f32.partialorder %v271, 18.0
      %v651 = vsel %vm650, 1.0, 0.0
      %v652 = vrot.slane %v651, 4
      %v653 = vadd.f32 %v651, %v652
      %v654 = vrot.slane %v653, 2
      %v655 = vadd.f32 %v653, %v654
      %v656 = vrot.slane %v655, 1
      %v657 = vadd.f32 %v655, %v656
      %v658 = vmul.f32 %v651, %v266
      %v659 = vrot.slane %v658, 4
      %v660 = vadd.f32 %v658, %v659
      %v661 = vrot.slane %v660, 2
      %v662 = vadd.f32 %v660, %v661
      %v663 = vrot.slane %v662, 1
      %v664 = vadd.f32 %v662, %v663
      %v665 = vld [vmem:[%s218 + $0x12] sm:$0x1]
      %v666 = vadd.f32 %v665, %v657
      %667 = vst [vmem:[%s218 + $0x12] sm:$0x1] %v666
      %v668 = vld [vmem:[%s224 + $0x12] sm:$0x1]
      %v669 = vadd.f32 %v668, %v664
      %670 = vst [vmem:[%s224 + $0x12] sm:$0x1] %v669
      %vm671 = vcmp.eq.f32.partialorder %v271, 19.0
      %v672 = vsel %vm671, 1.0, 0.0
      %v673 = vrot.slane %v672, 4
      %v674 = vadd.f32 %v672, %v673
      %v675 = vrot.slane %v674, 2
      %v676 = vadd.f32 %v674, %v675
      %v677 = vrot.slane %v676, 1
      %v678 = vadd.f32 %v676, %v677
      %v679 = vmul.f32 %v672, %v266
      %v680 = vrot.slane %v679, 4
      %v681 = vadd.f32 %v679, %v680
      %v682 = vrot.slane %v681, 2
      %v683 = vadd.f32 %v681, %v682
      %v684 = vrot.slane %v683, 1
      %v685 = vadd.f32 %v683, %v684
      %v686 = vld [vmem:[%s218 + $0x13] sm:$0x1]
      %v687 = vadd.f32 %v686, %v678
      %688 = vst [vmem:[%s218 + $0x13] sm:$0x1] %v687
      %v689 = vld [vmem:[%s224 + $0x13] sm:$0x1]
      %v690 = vadd.f32 %v689, %v685
      %691 = vst [vmem:[%s224 + $0x13] sm:$0x1] %v690
      %vm692 = vcmp.eq.f32.partialorder %v271, 20.0
      %v693 = vsel %vm692, 1.0, 0.0
      %v694 = vrot.slane %v693, 4
      %v695 = vadd.f32 %v693, %v694
      %v696 = vrot.slane %v695, 2
      %v697 = vadd.f32 %v695, %v696
      %v698 = vrot.slane %v697, 1
      %v699 = vadd.f32 %v697, %v698
      %v700 = vmul.f32 %v693, %v266
      %v701 = vrot.slane %v700, 4
      %v702 = vadd.f32 %v700, %v701
      %v703 = vrot.slane %v702, 2
      %v704 = vadd.f32 %v702, %v703
      %v705 = vrot.slane %v704, 1
      %v706 = vadd.f32 %v704, %v705
      %v707 = vld [vmem:[%s218 + $0x14] sm:$0x1]
      %v708 = vadd.f32 %v707, %v699
      %709 = vst [vmem:[%s218 + $0x14] sm:$0x1] %v708
      %v710 = vld [vmem:[%s224 + $0x14] sm:$0x1]
      %v711 = vadd.f32 %v710, %v706
      %712 = vst [vmem:[%s224 + $0x14] sm:$0x1] %v711
      %vm713 = vcmp.eq.f32.partialorder %v271, 21.0
      %v714 = vsel %vm713, 1.0, 0.0
      %v715 = vrot.slane %v714, 4
      %v716 = vadd.f32 %v714, %v715
      %v717 = vrot.slane %v716, 2
      %v718 = vadd.f32 %v716, %v717
      %v719 = vrot.slane %v718, 1
      %v720 = vadd.f32 %v718, %v719
      %v721 = vmul.f32 %v714, %v266
      %v722 = vrot.slane %v721, 4
      %v723 = vadd.f32 %v721, %v722
      %v724 = vrot.slane %v723, 2
      %v725 = vadd.f32 %v723, %v724
      %v726 = vrot.slane %v725, 1
      %v727 = vadd.f32 %v725, %v726
      %v728 = vld [vmem:[%s218 + $0x15] sm:$0x1]
      %v729 = vadd.f32 %v728, %v720
      %730 = vst [vmem:[%s218 + $0x15] sm:$0x1] %v729
      %v731 = vld [vmem:[%s224 + $0x15] sm:$0x1]
      %v732 = vadd.f32 %v731, %v727
      %733 = vst [vmem:[%s224 + $0x15] sm:$0x1] %v732
      %vm734 = vcmp.eq.f32.partialorder %v271, 22.0
      %v735 = vsel %vm734, 1.0, 0.0
      %v736 = vrot.slane %v735, 4
      %v737 = vadd.f32 %v735, %v736
      %v738 = vrot.slane %v737, 2
      %v739 = vadd.f32 %v737, %v738
      %v740 = vrot.slane %v739, 1
      %v741 = vadd.f32 %v739, %v740
      %v742 = vmul.f32 %v735, %v266
      %v743 = vrot.slane %v742, 4
      %v744 = vadd.f32 %v742, %v743
      %v745 = vrot.slane %v744, 2
      %v746 = vadd.f32 %v744, %v745
      %v747 = vrot.slane %v746, 1
      %v748 = vadd.f32 %v746, %v747
      %v749 = vld [vmem:[%s218 + $0x16] sm:$0x1]
      %v750 = vadd.f32 %v749, %v741
      %751 = vst [vmem:[%s218 + $0x16] sm:$0x1] %v750
      %v752 = vld [vmem:[%s224 + $0x16] sm:$0x1]
      %v753 = vadd.f32 %v752, %v748
      %754 = vst [vmem:[%s224 + $0x16] sm:$0x1] %v753
      %vm755 = vcmp.eq.f32.partialorder %v271, 23.0
      %v756 = vsel %vm755, 1.0, 0.0
      %v757 = vrot.slane %v756, 4
      %v758 = vadd.f32 %v756, %v757
      %v759 = vrot.slane %v758, 2
      %v760 = vadd.f32 %v758, %v759
      %v761 = vrot.slane %v760, 1
      %v762 = vadd.f32 %v760, %v761
      %v763 = vmul.f32 %v756, %v266
      %v764 = vrot.slane %v763, 4
      %v765 = vadd.f32 %v763, %v764
      %v766 = vrot.slane %v765, 2
      %v767 = vadd.f32 %v765, %v766
      %v768 = vrot.slane %v767, 1
      %v769 = vadd.f32 %v767, %v768
      %v770 = vld [vmem:[%s218 + $0x17] sm:$0x1]
      %v771 = vadd.f32 %v770, %v762
      %772 = vst [vmem:[%s218 + $0x17] sm:$0x1] %v771
      %v773 = vld [vmem:[%s224 + $0x17] sm:$0x1]
      %v774 = vadd.f32 %v773, %v769
      %775 = vst [vmem:[%s224 + $0x17] sm:$0x1] %v774
      %vm776 = vcmp.eq.f32.partialorder %v271, 24.0
      %v777 = vsel %vm776, 1.0, 0.0
      %v778 = vrot.slane %v777, 4
      %v779 = vadd.f32 %v777, %v778
      %v780 = vrot.slane %v779, 2
      %v781 = vadd.f32 %v779, %v780
      %v782 = vrot.slane %v781, 1
      %v783 = vadd.f32 %v781, %v782
      %v784 = vmul.f32 %v777, %v266
      %v785 = vrot.slane %v784, 4
      %v786 = vadd.f32 %v784, %v785
      %v787 = vrot.slane %v786, 2
      %v788 = vadd.f32 %v786, %v787
      %v789 = vrot.slane %v788, 1
      %v790 = vadd.f32 %v788, %v789
      %v791 = vld [vmem:[%s218 + $0x18] sm:$0x1]
      %v792 = vadd.f32 %v791, %v783
      %793 = vst [vmem:[%s218 + $0x18] sm:$0x1] %v792
      %v794 = vld [vmem:[%s224 + $0x18] sm:$0x1]
      %v795 = vadd.f32 %v794, %v790
      %796 = vst [vmem:[%s224 + $0x18] sm:$0x1] %v795
      %vm797 = vcmp.eq.f32.partialorder %v271, 25.0
      %v798 = vsel %vm797, 1.0, 0.0
      %v799 = vrot.slane %v798, 4
      %v800 = vadd.f32 %v798, %v799
      %v801 = vrot.slane %v800, 2
      %v802 = vadd.f32 %v800, %v801
      %v803 = vrot.slane %v802, 1
      %v804 = vadd.f32 %v802, %v803
      %v805 = vmul.f32 %v798, %v266
      %v806 = vrot.slane %v805, 4
      %v807 = vadd.f32 %v805, %v806
      %v808 = vrot.slane %v807, 2
      %v809 = vadd.f32 %v807, %v808
      %v810 = vrot.slane %v809, 1
      %v811 = vadd.f32 %v809, %v810
      %v812 = vld [vmem:[%s218 + $0x19] sm:$0x1]
      %v813 = vadd.f32 %v812, %v804
      %814 = vst [vmem:[%s218 + $0x19] sm:$0x1] %v813
      %v815 = vld [vmem:[%s224 + $0x19] sm:$0x1]
      %v816 = vadd.f32 %v815, %v811
      %817 = vst [vmem:[%s224 + $0x19] sm:$0x1] %v816
      %vm818 = vcmp.eq.f32.partialorder %v271, 26.0
      %v819 = vsel %vm818, 1.0, 0.0
      %v820 = vrot.slane %v819, 4
      %v821 = vadd.f32 %v819, %v820
      %v822 = vrot.slane %v821, 2
      %v823 = vadd.f32 %v821, %v822
      %v824 = vrot.slane %v823, 1
      %v825 = vadd.f32 %v823, %v824
      %v826 = vmul.f32 %v819, %v266
      %v827 = vrot.slane %v826, 4
      %v828 = vadd.f32 %v826, %v827
      %v829 = vrot.slane %v828, 2
      %v830 = vadd.f32 %v828, %v829
      %v831 = vrot.slane %v830, 1
      %v832 = vadd.f32 %v830, %v831
      %v833 = vld [vmem:[%s218 + $0x1a] sm:$0x1]
      %v834 = vadd.f32 %v833, %v825
      %835 = vst [vmem:[%s218 + $0x1a] sm:$0x1] %v834
      %v836 = vld [vmem:[%s224 + $0x1a] sm:$0x1]
      %v837 = vadd.f32 %v836, %v832
      %838 = vst [vmem:[%s224 + $0x1a] sm:$0x1] %v837
      %vm839 = vcmp.eq.f32.partialorder %v271, 27.0
      %v840 = vsel %vm839, 1.0, 0.0
      %v841 = vrot.slane %v840, 4
      %v842 = vadd.f32 %v840, %v841
      %v843 = vrot.slane %v842, 2
      %v844 = vadd.f32 %v842, %v843
      %v845 = vrot.slane %v844, 1
      %v846 = vadd.f32 %v844, %v845
      %v847 = vmul.f32 %v840, %v266
      %v848 = vrot.slane %v847, 4
      %v849 = vadd.f32 %v847, %v848
      %v850 = vrot.slane %v849, 2
      %v851 = vadd.f32 %v849, %v850
      %v852 = vrot.slane %v851, 1
      %v853 = vadd.f32 %v851, %v852
      %v854 = vld [vmem:[%s218 + $0x1b] sm:$0x1]
      %v855 = vadd.f32 %v854, %v846
      %856 = vst [vmem:[%s218 + $0x1b] sm:$0x1] %v855
      %v857 = vld [vmem:[%s224 + $0x1b] sm:$0x1]
      %v858 = vadd.f32 %v857, %v853
      %859 = vst [vmem:[%s224 + $0x1b] sm:$0x1] %v858
      %vm860 = vcmp.eq.f32.partialorder %v271, 28.0
      %v861 = vsel %vm860, 1.0, 0.0
      %v862 = vrot.slane %v861, 4
      %v863 = vadd.f32 %v861, %v862
      %v864 = vrot.slane %v863, 2
      %v865 = vadd.f32 %v863, %v864
      %v866 = vrot.slane %v865, 1
      %v867 = vadd.f32 %v865, %v866
      %v868 = vmul.f32 %v861, %v266
      %v869 = vrot.slane %v868, 4
      %v870 = vadd.f32 %v868, %v869
      %v871 = vrot.slane %v870, 2
      %v872 = vadd.f32 %v870, %v871
      %v873 = vrot.slane %v872, 1
      %v874 = vadd.f32 %v872, %v873
      %v875 = vld [vmem:[%s218 + $0x1c] sm:$0x1]
      %v876 = vadd.f32 %v875, %v867
      %877 = vst [vmem:[%s218 + $0x1c] sm:$0x1] %v876
      %v878 = vld [vmem:[%s224 + $0x1c] sm:$0x1]
      %v879 = vadd.f32 %v878, %v874
      %880 = vst [vmem:[%s224 + $0x1c] sm:$0x1] %v879
      %vm881 = vcmp.eq.f32.partialorder %v271, 29.0
      %v882 = vsel %vm881, 1.0, 0.0
      %v883 = vrot.slane %v882, 4
      %v884 = vadd.f32 %v882, %v883
      %v885 = vrot.slane %v884, 2
      %v886 = vadd.f32 %v884, %v885
      %v887 = vrot.slane %v886, 1
      %v888 = vadd.f32 %v886, %v887
      %v889 = vmul.f32 %v882, %v266
      %v890 = vrot.slane %v889, 4
      %v891 = vadd.f32 %v889, %v890
      %v892 = vrot.slane %v891, 2
      %v893 = vadd.f32 %v891, %v892
      %v894 = vrot.slane %v893, 1
      %v895 = vadd.f32 %v893, %v894
      %v896 = vld [vmem:[%s218 + $0x1d] sm:$0x1]
      %v897 = vadd.f32 %v896, %v888
      %898 = vst [vmem:[%s218 + $0x1d] sm:$0x1] %v897
      %v899 = vld [vmem:[%s224 + $0x1d] sm:$0x1]
      %v900 = vadd.f32 %v899, %v895
      %901 = vst [vmem:[%s224 + $0x1d] sm:$0x1] %v900
      %s902 = smul.u32 4, %s19
      %p903 = scmp.lt.s32.totalorder %s902, 7
      %s904 = scalar_select %p903, %s902, 7
      %s905 = smul.addr %s904, 8
      %s906 = scalar_lea.vmem %s2, %s905
      %s907 = smul.u32 4, %s19
      %p908 = scmp.lt.s32.totalorder %s907, 7
      %s909 = scalar_select %p908, %s907, 7
      %s910 = smul.addr %s909, 8
      %s911 = scalar_lea.vmem %s3, %s910
      // Predicated region
      $region33: #{ghmc_loss.1} parent=27 // pred_check
        %p912 = pneg %p101
      $region34: #{ghmc_loss.1} parent=27 // pred_check_branch
        %914 = sbr.rel (%p912) target = $region36
      $region35: #{ghmc_loss.1} parent=27 // pred_region
        %s915 = smul.u32 4, %s19
      $region36: #{ghmc_loss.1} parent=27 // pred_fallthru
        _
      // Predicated region
      $region37: #{ghmc_loss.1} parent=27 // pred_check
        %p916 = pneg %p127
      $region38: #{ghmc_loss.1} parent=27 // pred_check_branch
        %918 = sbr.rel (%p916) target = $region40
      $region39: #{ghmc_loss.1} parent=27 // pred_region
        %s919 = smul.u32 4, %s19
      $region40: #{ghmc_loss.1} parent=27 // pred_fallthru
        _
    $region28: #{ghmc_loss.1} parent=5 // pred_fallthru
      _
    %p920 = scmp.le.s32.totalorder 2, %s10
    // Predicated region
    $region41: #{ghmc_loss.1} parent=5 // pred_check
      %p921 = pneg %p920
    $region42: #{ghmc_loss.1} parent=5 // pred_check_branch
      %923 = sbr.rel (%p921) target = $region44
    $region43: #{ghmc_loss.1} parent=5 // pred_region
      %s924 = ssub.s32 %s10, 2
      // Predicated region
      $region45: #{ghmc_loss.1} parent=43 // pred_check
        %p925 = pneg %p107
      $region46: #{ghmc_loss.1} parent=43 // pred_check_branch
        %927 = sbr.rel (%p925) target = $region48
      $region47: #{ghmc_loss.1} parent=43 // pred_region
        %s928 = smul.u32 4, %s21
        %p929 = scmp.lt.s32.totalorder %s928, 7
        %s930 = scalar_select %p929, %s928, 7
        %s931 = smul.addr %s930, 8
        %s932 = scalar_lea.vmem %s2, %s931
      $region48: #{ghmc_loss.1} parent=43 // pred_fallthru
        _
      // Predicated region
      $region49: #{ghmc_loss.1} parent=43 // pred_check
        %p933 = pneg %p133
      $region50: #{ghmc_loss.1} parent=43 // pred_check_branch
        %935 = sbr.rel (%p933) target = $region52
      $region51: #{ghmc_loss.1} parent=43 // pred_region
        %s936 = smul.u32 4, %s21
        %p937 = scmp.lt.s32.totalorder %s936, 7
        %s938 = scalar_select %p937, %s936, 7
        %s939 = smul.addr %s938, 8
        %s940 = scalar_lea.vmem %s3, %s939
      $region52: #{ghmc_loss.1} parent=43 // pred_fallthru
        _
    $region44: #{ghmc_loss.1} parent=5 // pred_fallthru
      _
  $region6: #{ghmc_loss.1} parent=0 // loop_footer
    %s14 = sadd.s32 1, %s10
  $region7: #{ghmc_loss.1} parent=0 // loop_footer_branch
    %9 = sbr.rel target = $region3
  $region8: #{ghmc_loss.1} parent=0 // loop_exit
    _

</llo_original>
